<compile_context>
chip_gen: v5e
topology: v5e:2x2
jax: 0.10.0
libtpu: 0.0.40
codegen_flags: <defaults>
</compile_context>

<pallas_src>
import jax
import jax.numpy as jnp
from jax import lax
from jax.experimental import pallas as pl
from jax.experimental.pallas import tpu as pltpu


def _round_up(x, m):
    return ((x + m - 1) // m) * m


# ----------------------------------------------------------------------------
# Kernel 1: fused encoder (LSTM recurrence + heads + discriminator + motivator)
# ----------------------------------------------------------------------------
def encoder_fused_kernel(
        x_ref, len_ref,
        w_ih_ref, w_hh_ref, b_ref,
        sent_w_ref, sent_b_ref, other_w_ref, other_b_ref,
        dis_w1_ref, dis_b1_ref, dis_w2_ref, dis_b2_ref,
        mot_w1_ref, mot_b1_ref, mot_w2_ref, mot_b2_ref,
        sent_ref, other_ref, dis_ref, moti_ref, repre_ref,
        h_sc, c_sc, xw_sc):
    T, Bp, E = x_ref.shape
    H = h_sc.shape[-1]

    h_sc[...] = jnp.zeros(h_sc.shape, h_sc.dtype)
    c_sc[...] = jnp.zeros(c_sc.shape, c_sc.dtype)

    # --- hoisted input projection: one big MXU matmul, bias folded in ---
    x_all = x_ref[...].reshape(T * Bp, E)
    xw = (jnp.dot(x_all, w_ih_ref[...], preferred_element_type=jnp.float32)
          + b_ref[...])                                   # (T*Bp, 4H)
    xw_sc[...] = xw.reshape(T, Bp, 4 * H)

    # Hoist recurrent weight / lengths out of the time loop.
    w_hh = w_hh_ref[...]
    lens = len_ref[...]                                   # (Bp, 1) int32

    def step(t, carry):
        h = h_sc[...]
        c = c_sc[...]
        gates = xw_sc[t] + jnp.dot(h, w_hh, preferred_element_type=jnp.float32)
        i_g = jax.nn.sigmoid(gates[:, 0 * H:1 * H])
        f_g = jax.nn.sigmoid(gates[:, 1 * H:2 * H])
        g_g = jnp.tanh(gates[:, 2 * H:3 * H])
        o_g = jax.nn.sigmoid(gates[:, 3 * H:4 * H])
        c_new = f_g * c + i_g * g_g
        h_new = o_g * jnp.tanh(c_new)
        valid = t < lens                                  # (Bp, 1): freeze on padding
        c_sc[...] = jnp.where(valid, c_new, c)
        h_sc[...] = jnp.where(valid, h_new, h)
        return carry

    lax.fori_loop(0, T, step, 0, unroll=(T if T <= 16 else 4))

    h_last = h_sc[...]                                    # last valid hidden per row
    sent = (jnp.dot(h_last, sent_w_ref[...], preferred_element_type=jnp.float32)
            + sent_b_ref[...])
    other = (jnp.dot(h_last, other_w_ref[...], preferred_element_type=jnp.float32)
             + other_b_ref[...])

    # Discriminator / Motivator: Linear -> ReLU -> Linear (dropout = eval no-op).
    dh = jnp.maximum(
        jnp.dot(other, dis_w1_ref[...], preferred_element_type=jnp.float32)
        + dis_b1_ref[...], 0.0)
    dis = (jnp.dot(dh, dis_w2_ref[...], preferred_element_type=jnp.float32)
           + dis_b2_ref[...])
    mh = jnp.maximum(
        jnp.dot(sent, mot_w1_ref[...], preferred_element_type=jnp.float32)
        + mot_b1_ref[...], 0.0)
    moti = (jnp.dot(mh, mot_w2_ref[...], preferred_element_type=jnp.float32)
            + mot_b2_ref[...])

    sent_ref[...] = sent
    other_ref[...] = other
    dis_ref[...] = dis
    moti_ref[...] = moti
    repre_ref[...] = sent + other                         # new_representation


# ----------------------------------------------------------------------------
# Kernel 2: fused decoder (LSTM recurrence + bf16 V-chunked vocab head
#           + fused argmax)
# ----------------------------------------------------------------------------
def decoder_fused_kernel(
        x_ref, h0_ref, w_ih_ref, w_hh_ref, b_ref, w_out_ref, b_out_ref,
        logits_ref, pred_ref,
        hst_tm_sc, hst_bm_sc, h_sc, c_sc, bval_sc, bidx_sc, xw_sc):
    v = pl.program_id(0)                                  # vocab-chunk index
    T, Bp, E = x_ref.shape
    S = h_sc.shape[-1]
    VC = w_out_ref.shape[-1]

    @pl.when(v == 0)
    def _recurrence():
        h_sc[...] = h0_ref[...]                           # init from new_representation
        c_sc[...] = jnp.zeros(c_sc.shape, c_sc.dtype)
        bval_sc[...] = jnp.full(bval_sc.shape, -jnp.inf, bval_sc.dtype)
        bidx_sc[...] = jnp.zeros(bidx_sc.shape, bidx_sc.dtype)

        # Hoisted input projection (bias folded) -> VMEM scratch, read per step.
        x_all = x_ref[...].reshape(T * Bp, E)
        xw = (jnp.dot(x_all, w_ih_ref[...], preferred_element_type=jnp.float32)
              + b_ref[...])                               # (T*Bp, 4S)
        xw_sc[...] = xw.reshape(T, Bp, 4 * S)

        w_hh = w_hh_ref[...]

        def step(t, carry):
            h = h_sc[...]
            c = c_sc[...]
            gates = xw_sc[t] + jnp.dot(h, w_hh, preferred_element_type=jnp.float32)
            i_g = jax.nn.sigmoid(gates[:, 0 * S:1 * S])
            f_g = jax.nn.sigmoid(gates[:, 1 * S:2 * S])
            g_g = jnp.tanh(gates[:, 2 * S:3 * S])
            o_g = jax.nn.sigmoid(gates[:, 3 * S:4 * S])
            c_new = f_g * c + i_g * g_g
            h_new = o_g * jnp.tanh(c_new)
            h_sc[...] = h_new
            c_sc[...] = c_new
            # One full-width contiguous store per step (time-major layout).
            base = pl.multiple_of(t * Bp, Bp)
            hst_tm_sc[pl.ds(base, Bp), :] = h_new
            return carry

        lax.fori_loop(0, T, step, 0, unroll=(T if T <= 16 else 4))

        # One-time re-layout to batch-major rows (row = b*T + t) so projected
        # logits come out batch-first with no XLA transpose of the big tensor.
        hs_tm = hst_tm_sc[...].reshape(T, Bp, S)
        hst_bm_sc[...] = pltpu.einshape("tbs->bts", hs_tm).reshape(Bp * T, S)

    # ---- batched, lane-dense vocab projection for this V chunk (bf16 MXU) ----
    hs = hst_bm_sc[...]                                   # (Bp*T, S) f32
    logits_v = (jnp.dot(hs.astype(w_out_ref.dtype), w_out_ref[...],
                        preferred_element_type=jnp.float32)
                + b_out_ref[...])                         # (Bp*T, VC) f32
    logits_ref[...] = logits_v

    # ---- fused running argmax across V chunks (first-occurrence ties) ----
    local_max = jnp.max(logits_v, axis=-1, keepdims=True)  # (Bp*T, 1)
    col = (lax.broadcasted_iota(jnp.int32, logits_v.shape, 1)
           + v * VC).astype(jnp.float32)
    cand = jnp.where(logits_v == local_max, col, jnp.float32(1e30))
    local_idx = jnp.min(cand, axis=-1, keepdims=True)       # (Bp*T, 1) f32
    better = local_max > bval_sc[...]
    bval_sc[...] = jnp.where(better, local_max, bval_sc[...])
    bidx_sc[...] = jnp.where(better, local_idx, bidx_sc[...])
    # NOTE: argmax index carried as f32 -> exact for vocab_size < 2^24.

    @pl.when(v == pl.num_programs(0) - 1)
    def _finalize():
        pred_ref[...] = bidx_sc[...].astype(jnp.int32)


# ----------------------------------------------------------------------------
# pallas_call wrappers
# ----------------------------------------------------------------------------
def _full_spec(shape):
    n = len(shape)
    return pl.BlockSpec(shape, lambda *_, _n=n: (0,) * _n)


def run_encoder(x_emb, lens, p):
    T, Bp, E = x_emb.shape
    H = p["enc_w_hh"].shape[0]
    S = p["sent_w"].shape[1]
    O = p["dis_w2"].shape[1]

    out_shape = (
        jax.ShapeDtypeStruct((Bp, S), jnp.float32),   # sentiment_hidden
        jax.ShapeDtypeStruct((Bp, S), jnp.float32),   # other_hidden
        jax.ShapeDtypeStruct((Bp, O), jnp.float32),   # dis_out
        jax.ShapeDtypeStruct((Bp, O), jnp.float32),   # moti_out
        jax.ShapeDtypeStruct((Bp, S), jnp.float32),   # new_representation
    )
    return pl.pallas_call(
        encoder_fused_kernel,
        out_shape=out_shape,
        grid_spec=pltpu.PrefetchScalarGridSpec(
            num_scalar_prefetch=0,
            grid=(1,),
            in_specs=[
                _full_spec((T, Bp, E)), _full_spec((Bp, 1)),
                _full_spec((E, 4 * H)), _full_spec((H, 4 * H)), _full_spec((1, 4 * H)),
                _full_spec((H, S)), _full_spec((1, S)),
                _full_spec((H, S)), _full_spec((1, S)),
                _full_spec((S, H)), _full_spec((1, H)),
                _full_spec((H, O)), _full_spec((1, O)),
                _full_spec((S, H)), _full_spec((1, H)),
                _full_spec((H, O)), _full_spec((1, O)),
            ],
            out_specs=[_full_spec((Bp, S)), _full_spec((Bp, S)),
                       _full_spec((Bp, O)), _full_spec((Bp, O)),
                       _full_spec((Bp, S))],
            scratch_shapes=[
                pltpu.VMEM((Bp, H), jnp.float32),        # h
                pltpu.VMEM((Bp, H), jnp.float32),        # c
                pltpu.VMEM((T, Bp, 4 * H), jnp.float32),  # hoisted x @ W_ih (+b)
            ],
        ),
        compiler_params=pltpu.CompilerParams(
            dimension_semantics=("arbitrary",),
            vmem_limit_bytes=64 * 1024 * 1024),
    )(x_emb, lens,
      p["enc_w_ih"], p["enc_w_hh"], p["enc_b"],
      p["sent_w"], p["sent_b"], p["other_w"], p["other_b"],
      p["dis_w1"], p["dis_b1"], p["dis_w2"], p["dis_b2"],
      p["mot_w1"], p["mot_b1"], p["mot_w2"], p["mot_b2"])


def run_decoder(t_emb, h0, p):
    T, Bp, E = t_emb.shape
    S = p["dec_w_hh"].shape[0]
    V = p["dec_out_w"].shape[1]
    M = Bp * T

    # Lane-dense, chunk-aligned vocab padding: pad columns of W_out with zeros
    # and padded bias with a huge negative so the fused argmax ignores them.
    # v5e/v6e (128 MiB VMEM): VC up to 1024-2048 is profitable; v7x (64 MiB):
    # keep VC at 256-512 and budget VMEM for production shapes.
    if V <= 512:
        Vp = _round_up(V, 128)
        VC = Vp
    else:
        Vp = _round_up(V, 512)
        VC = 512
    nvc = Vp // VC

    w_out = p["dec_out_w"]
    b_out = p["dec_out_b"]
    if Vp != V:
        w_out = jnp.pad(w_out, ((0, 0), (0, Vp - V)))
        b_out = jnp.pad(b_out, ((0, 0), (0, Vp - V)), constant_values=-1e30)
    # Stream the vocab head in bf16 (halves DMA bytes; f32 accumulation kept).
    w_out = w_out.astype(jnp.bfloat16)
    b_out = b_out.astype(jnp.float32)

    out_shape = (
        jax.ShapeDtypeStruct((M, Vp), jnp.float32),   # logits (batch-major rows)
        jax.ShapeDtypeStruct((M, 1), jnp.int32),      # argmax predictions
    )
    logits_flat, preds_flat = pl.pallas_call(
        decoder_fused_kernel,
        out_shape=out_shape,
        grid_spec=pltpu.PrefetchScalarGridSpec(
            num_scalar_prefetch=0,
            grid=(nvc,),
            in_specs=[
                pl.BlockSpec((T, Bp, E), lambda v: (0, 0, 0)),
                pl.BlockSpec((Bp, S), lambda v: (0, 0)),
                pl.BlockSpec((E, 4 * S), lambda v: (0, 0)),
                pl.BlockSpec((S, 4 * S), lambda v: (0, 0)),
                pl.BlockSpec((1, 4 * S), lambda v: (0, 0)),
                pl.BlockSpec((S, VC), lambda v: (0, v)),   # streamed W_out chunk
                pl.BlockSpec((1, VC), lambda v: (0, v)),
            ],
            out_specs=[
                pl.BlockSpec((M, VC), lambda v: (0, v)),   # lane-dense logits slab
                pl.BlockSpec((M, 1), lambda v: (0, 0)),
            ],
            scratch_shapes=[
                pltpu.VMEM((M, S), jnp.float32),          # time-major hidden states
                pltpu.VMEM((M, S), jnp.float32),          # batch-major hidden states
                pltpu.VMEM((Bp, S), jnp.float32),         # h
                pltpu.VMEM((Bp, S), jnp.float32),         # c
                pltpu.VMEM((M, 1), jnp.float32),          # running max
                pltpu.VMEM((M, 1), jnp.float32),          # running argmax (f32)
                pltpu.VMEM((T, Bp, 4 * S), jnp.float32),  # hoisted x @ W_ih (+b)
            ],
        ),
        compiler_params=pltpu.CompilerParams(
            dimension_semantics=("arbitrary",),
            vmem_limit_bytes=64 * 1024 * 1024),
    )(t_emb, h0, p["dec_w_ih"], p["dec_w_hh"], p["dec_b"], w_out, b_out)
    return logits_flat, preds_flat, V


# ----------------------------------------------------------------------------
# ADNet forward
# ----------------------------------------------------------------------------
def _pad_rows(x, n):
    if x.shape[0] == n:
        return x
    pad_width = [(0, n - x.shape[0])] + [(0, 0)] * (x.ndim - 1)
    return jnp.pad(x, pad_width)


def adnet_forward(params, inputs, targets, lengths):
    """inputs, targets: int32 [B, T] token ids; lengths: int32 [B]."""
    B, T = inputs.shape
    V, _ = params["embedding"].shape

    # Pad batch to the f32 sublane quantum (8) for full vreg / MXU row fill.
    Bp = ((B + 7) // 8) * 8
    inputs_p = _pad_rows(inputs, Bp)
    targets_p = _pad_rows(targets, Bp)
    lens_p = _pad_rows(lengths, Bp).astype(jnp.int32).reshape(Bp, 1)

    emb = params["embedding"]
    # Gather time-major directly: transpose the tiny int32 ids, not [B,T,E].
    x_emb = jnp.take(emb, inputs_p.T, axis=0)     # (T, Bp, E)
    t_emb = jnp.take(emb, targets_p.T, axis=0)    # (T, Bp, E)

    sent, other, dis_out, moti_out, new_repre = run_encoder(x_emb, lens_p, params)
    logits_flat, preds_flat, _ = run_decoder(t_emb, new_repre, params)

    logits = logits_flat[:, :V].reshape(Bp, T, V)[:B]   # batch-first, reshape only
    predictions = preds_flat.reshape(Bp, T)[:B]

    return {
        "dis_out": dis_out[:B],
        "moti_out": moti_out[:B],
        "logits": logits,
        "prediction": predictions,
        "sentiment_hidden": sent[:B],
        "other_hidden": other[:B],
        "new_repre": new_repre[:B],
    }


# ----------------------------------------------------------------------------
# Deterministic parameter init (synthetic, no checkpoint)
# ----------------------------------------------------------------------------
def init_params(key, vocab_size, input_size, hidden_size, sentiment_size,
                output_size):
    ks = iter(jax.random.split(key, 32))

    def w(shape, scale=0.1):
        return (scale * jax.random.normal(next(ks), shape)).astype(jnp.float32)

    E, H, S, V, O = input_size, hidden_size, sentiment_size, vocab_size, output_size
    return {
        "embedding": w((V, E)),
        # encoder LSTM (gate order i,f,g,o); bias = b_ih + b_hh folded
        "enc_w_ih": w((E, 4 * H)), "enc_w_hh": w((H, 4 * H)), "enc_b": w((1, 4 * H)),
        # sentiment / other projections
        "sent_w": w((H, S)), "sent_b": w((1, S)),
        "other_w": w((H, S)), "other_b": w((1, S)),
        # discriminator
        "dis_w1": w((S, H)), "dis_b1": w((1, H)),
        "dis_w2": w((H, O)), "dis_b2": w((1, O)),
        # motivator
        "mot_w1": w((S, H)), "mot_b1": w((1, H)),
        "mot_w2": w((H, O)), "mot_b2": w((1, O)),
        # decoder LSTM + vocab head
        "dec_w_ih": w((E, 4 * S)), "dec_w_hh": w((S, 4 * S)), "dec_b": w((1, 4 * S)),
        "dec_out_w": w((S, V)), "dec_out_b": w((1, V)),
    }


if __name__ == "__main__":
    B, T = 2, 8
    input_size, hidden_size, sentiment_size = 16, 32, 16
    vocab_size, output_size = 64, 2

    key = jax.random.PRNGKey(0)
    k_in, k_tg, k_p = jax.random.split(key, 3)
    inputs = jax.random.randint(k_in, (B, T), 0, vocab_size, dtype=jnp.int32)
    targets = jax.random.randint(k_tg, (B, T), 0, vocab_size, dtype=jnp.int32)
    lengths = jnp.array([T, 5], dtype=jnp.int32)

    params = init_params(k_p, vocab_size, input_size, hidden_size,
                         sentiment_size, output_size)

    state = adnet_forward(params, inputs, targets, lengths)
    state = jax.tree_util.tree_map(jax.block_until_ready, state)

    assert state["logits"].shape == (B, T, vocab_size)
    assert state["prediction"].shape == (B, T)
    assert state["dis_out"].shape == (B, output_size)
    assert state["moti_out"].shape == (B, output_size)
    assert state["sentiment_hidden"].shape == (B, sentiment_size)
    assert state["other_hidden"].shape == (B, sentiment_size)
    assert state["new_repre"].shape == (B, sentiment_size)
    assert bool(jnp.all(state["prediction"] >= 0)) and \
        bool(jnp.all(state["prediction"] < vocab_size))
    assert bool(jnp.all(jnp.isfinite(state["logits"])))
    print("KERNEL_OK")
</pallas_src>

<mosaic_0001>
module attributes {stable_mosaic.version = 11 : i64} {
  func.func @encoder_fused_kernel(%arg0: i32, %arg1: memref<8x8x16xf32, #tpu.memory_space<vmem>>, %arg2: memref<8x1xi32, #tpu.memory_space<vmem>>, %arg3: memref<16x128xf32, #tpu.memory_space<vmem>>, %arg4: memref<32x128xf32, #tpu.memory_space<vmem>>, %arg5: memref<1x128xf32, #tpu.memory_space<vmem>>, %arg6: memref<32x16xf32, #tpu.memory_space<vmem>>, %arg7: memref<1x16xf32, #tpu.memory_space<vmem>>, %arg8: memref<32x16xf32, #tpu.memory_space<vmem>>, %arg9: memref<1x16xf32, #tpu.memory_space<vmem>>, %arg10: memref<16x32xf32, #tpu.memory_space<vmem>>, %arg11: memref<1x32xf32, #tpu.memory_space<vmem>>, %arg12: memref<32x2xf32, #tpu.memory_space<vmem>>, %arg13: memref<1x2xf32, #tpu.memory_space<vmem>>, %arg14: memref<16x32xf32, #tpu.memory_space<vmem>>, %arg15: memref<1x32xf32, #tpu.memory_space<vmem>>, %arg16: memref<32x2xf32, #tpu.memory_space<vmem>>, %arg17: memref<1x2xf32, #tpu.memory_space<vmem>>, %arg18: memref<8x16xf32, #tpu.memory_space<vmem>>, %arg19: memref<8x16xf32, #tpu.memory_space<vmem>>, %arg20: memref<8x2xf32, #tpu.memory_space<vmem>>, %arg21: memref<8x2xf32, #tpu.memory_space<vmem>>, %arg22: memref<8x16xf32, #tpu.memory_space<vmem>>, %arg23: memref<8x32xf32, #tpu.memory_space<vmem>>, %arg24: memref<8x32xf32, #tpu.memory_space<vmem>>, %arg25: memref<8x8x128xf32, #tpu.memory_space<vmem>>) attributes {dimension_semantics = [#tpu.dimension_semantics<arbitrary>], iteration_bounds = array<i64: 1>, scalar_prefetch = 0 : i64, scratch_operands = 3 : i64, tpu.core_type = #tpu.core_type<tc>, window_params = [{pipeline_mode = #tpu.pipeline_mode<synchronous>, transform_indices = @transform_0, window_bounds = array<i64: 8, 8, 16>}, {pipeline_mode = #tpu.pipeline_mode<synchronous>, transform_indices = @transform_1, window_bounds = array<i64: 8, 1>}, {pipeline_mode = #tpu.pipeline_mode<synchronous>, transform_indices = @transform_2, window_bounds = array<i64: 16, 128>}, {pipeline_mode = #tpu.pipeline_mode<synchronous>, transform_indices = @transform_3, window_bounds = array<i64: 32, 128>}, {pipeline_mode = #tpu.pipeline_mode<synchronous>, transform_indices = @transform_4, window_bounds = array<i64: 1, 128>}, {pipeline_mode = #tpu.pipeline_mode<synchronous>, transform_indices = @transform_5, window_bounds = array<i64: 32, 16>}, {pipeline_mode = #tpu.pipeline_mode<synchronous>, transform_indices = @transform_6, window_bounds = array<i64: 1, 16>}, {pipeline_mode = #tpu.pipeline_mode<synchronous>, transform_indices = @transform_7, window_bounds = array<i64: 32, 16>}, {pipeline_mode = #tpu.pipeline_mode<synchronous>, transform_indices = @transform_8, window_bounds = array<i64: 1, 16>}, {pipeline_mode = #tpu.pipeline_mode<synchronous>, transform_indices = @transform_9, window_bounds = array<i64: 16, 32>}, {pipeline_mode = #tpu.pipeline_mode<synchronous>, transform_indices = @transform_10, window_bounds = array<i64: 1, 32>}, {pipeline_mode = #tpu.pipeline_mode<synchronous>, transform_indices = @transform_11, window_bounds = array<i64: 32, 2>}, {pipeline_mode = #tpu.pipeline_mode<synchronous>, transform_indices = @transform_12, window_bounds = array<i64: 1, 2>}, {pipeline_mode = #tpu.pipeline_mode<synchronous>, transform_indices = @transform_13, window_bounds = array<i64: 16, 32>}, {pipeline_mode = #tpu.pipeline_mode<synchronous>, transform_indices = @transform_14, window_bounds = array<i64: 1, 32>}, {pipeline_mode = #tpu.pipeline_mode<synchronous>, transform_indices = @transform_15, window_bounds = array<i64: 32, 2>}, {pipeline_mode = #tpu.pipeline_mode<synchronous>, transform_indices = @transform_16, window_bounds = array<i64: 1, 2>}, {pipeline_mode = #tpu.pipeline_mode<synchronous>, transform_indices = @transform_17, window_bounds = array<i64: 8, 16>}, {pipeline_mode = #tpu.pipeline_mode<synchronous>, transform_indices = @transform_18, window_bounds = array<i64: 8, 16>}, {pipeline_mode = #tpu.pipeline_mode<synchronous>, transform_indices = @transform_19, window_bounds = array<i64: 8, 2>}, {pipeline_mode = #tpu.pipeline_mode<synchronous>, transform_indices = @transform_20, window_bounds = array<i64: 8, 2>}, {pipeline_mode = #tpu.pipeline_mode<synchronous>, transform_indices = @transform_21, window_bounds = array<i64: 8, 16>}]} {
    %cst = arith.constant 0.000000e+00 : f32
    %0 = vector.broadcast %cst : f32 to vector<8x32xf32>
    %c0 = arith.constant 0 : index
    %c0_0 = arith.constant 0 : index
    %1 = vector.load %arg23[%c0, %c0_0] : memref<8x32xf32, #tpu.memory_space<vmem>>, vector<8x32xf32>
    tpu.vector_store %arg23[%c0, %c0_0], %0 {strides = array<i32>} : memref<8x32xf32, #tpu.memory_space<vmem>>, vector<8x32xf32>,
    %cst_1 = arith.constant 0.000000e+00 : f32
    %2 = vector.broadcast %cst_1 : f32 to vector<8x32xf32>
    %c0_2 = arith.constant 0 : index
    %c0_3 = arith.constant 0 : index
    %3 = vector.load %arg24[%c0_2, %c0_3] : memref<8x32xf32, #tpu.memory_space<vmem>>, vector<8x32xf32>
    tpu.vector_store %arg24[%c0_2, %c0_3], %2 {strides = array<i32>} : memref<8x32xf32, #tpu.memory_space<vmem>>, vector<8x32xf32>,
    %c0_4 = arith.constant 0 : index
    %c0_5 = arith.constant 0 : index
    %c0_6 = arith.constant 0 : index
    %4 = vector.load %arg1[%c0_4, %c0_5, %c0_6] : memref<8x8x16xf32, #tpu.memory_space<vmem>>, vector<8x8x16xf32>
    %5 = vector.shape_cast %4 : vector<8x8x16xf32> to vector<64x16xf32>
    %c0_7 = arith.constant 0 : index
    %c0_8 = arith.constant 0 : index
    %6 = vector.load %arg3[%c0_7, %c0_8] : memref<16x128xf32, #tpu.memory_space<vmem>>, vector<16x128xf32>
    %cst_9 = arith.constant dense<0.000000e+00> : vector<64x128xf32>
    %7 = tpu.matmul %5, %6, %cst_9 {dimension_numbers = #tpu.dot_dimension_numbers<[1], [0], [0], [1], [0, 0, 1, 1], [], []>} : vector<64x16xf32>, vector<16x128xf32>, vector<64x128xf32> -> vector<64x128xf32>
    %c0_10 = arith.constant 0 : index
    %c0_11 = arith.constant 0 : index
    %8 = vector.load %arg5[%c0_10, %c0_11] : memref<1x128xf32, #tpu.memory_space<vmem>>, vector<1x128xf32>
    %9 = vector.broadcast %8 : vector<1x128xf32> to vector<64x128xf32>
    %10 = arith.addf %7, %9 : vector<64x128xf32>
    %11 = vector.shape_cast %10 : vector<64x128xf32> to vector<8x8x128xf32>
    %c0_12 = arith.constant 0 : index
    %c0_13 = arith.constant 0 : index
    %c0_14 = arith.constant 0 : index
    %12 = vector.load %arg25[%c0_12, %c0_13, %c0_14] : memref<8x8x128xf32, #tpu.memory_space<vmem>>, vector<8x8x128xf32>
    tpu.vector_store %arg25[%c0_12, %c0_13, %c0_14], %11 {strides = array<i32>} : memref<8x8x128xf32, #tpu.memory_space<vmem>>, vector<8x8x128xf32>,
    %c0_15 = arith.constant 0 : index
    %c0_16 = arith.constant 0 : index
    %13 = vector.load %arg4[%c0_15, %c0_16] : memref<32x128xf32, #tpu.memory_space<vmem>>, vector<32x128xf32>
    %c0_17 = arith.constant 0 : index
    %c0_18 = arith.constant 0 : index
    %14 = vector.load %arg2[%c0_17, %c0_18] : memref<8x1xi32, #tpu.memory_space<vmem>>, vector<8x1xi32>
    %c0_i32 = arith.constant 0 : i32
    %c0_19 = arith.constant 0 : index
    %c0_20 = arith.constant 0 : index
    %15 = vector.load %arg23[%c0_19, %c0_20] : memref<8x32xf32, #tpu.memory_space<vmem>>, vector<8x32xf32>
    %c0_21 = arith.constant 0 : index
    %c0_22 = arith.constant 0 : index
    %16 = vector.load %arg24[%c0_21, %c0_22] : memref<8x32xf32, #tpu.memory_space<vmem>>, vector<8x32xf32>
    %17 = arith.index_cast %c0_i32 : i32 to index
    %c0_23 = arith.constant 0 : index
    %c0_24 = arith.constant 0 : index
    %18 = vector.load %arg25[%17, %c0_23, %c0_24] : memref<8x8x128xf32, #tpu.memory_space<vmem>>, vector<1x8x128xf32>
    %19 = vector.shape_cast %18 : vector<1x8x128xf32> to vector<8x128xf32>
    %cst_25 = arith.constant dense<0.000000e+00> : vector<8x128xf32>
    %20 = tpu.matmul %15, %13, %cst_25 {dimension_numbers = #tpu.dot_dimension_numbers<[1], [0], [0], [1], [0, 0, 1, 1], [], []>} : vector<8x32xf32>, vector<32x128xf32>, vector<8x128xf32> -> vector<8x128xf32>
    %21 = arith.addf %19, %20 : vector<8x128xf32>
    %22 = vector.extract_strided_slice %21 {offsets = [0, 0], sizes = [8, 32], strides = [1, 1]} : vector<8x128xf32> to vector<8x32xf32>
    %23 = arith.negf %22 : vector<8x32xf32>
    %24 = math.exp %23 : vector<8x32xf32>
    %cst_26 = arith.constant 1.000000e+00 : f32
    %25 = vector.broadcast %cst_26 : f32 to vector<8x32xf32>
    %26 = arith.addf %25, %24 : vector<8x32xf32>
    %27 = arith.divf %25, %26 : vector<8x32xf32>
    %28 = vector.extract_strided_slice %21 {offsets = [0, 32], sizes = [8, 32], strides = [1, 1]} : vector<8x128xf32> to vector<8x32xf32>
    %29 = arith.negf %28 : vector<8x32xf32>
    %30 = math.exp %29 : vector<8x32xf32>
    %cst_27 = arith.constant 1.000000e+00 : f32
    %31 = vector.broadcast %cst_27 : f32 to vector<8x32xf32>
    %32 = arith.addf %31, %30 : vector<8x32xf32>
    %33 = arith.divf %31, %32 : vector<8x32xf32>
    %34 = vector.extract_strided_slice %21 {offsets = [0, 64], sizes = [8, 32], strides = [1, 1]} : vector<8x128xf32> to vector<8x32xf32>
    %35 = math.tanh %34 : vector<8x32xf32>
    %36 = vector.extract_strided_slice %21 {offsets = [0, 96], sizes = [8, 32], strides = [1, 1]} : vector<8x128xf32> to vector<8x32xf32>
    %37 = arith.negf %36 : vector<8x32xf32>
    %38 = math.exp %37 : vector<8x32xf32>
    %cst_28 = arith.constant 1.000000e+00 : f32
    %39 = vector.broadcast %cst_28 : f32 to vector<8x32xf32>
    %40 = arith.addf %39, %38 : vector<8x32xf32>
    %41 = arith.divf %39, %40 : vector<8x32xf32>
    %42 = arith.mulf %33, %16 : vector<8x32xf32>
    %43 = arith.mulf %27, %35 : vector<8x32xf32>
    %44 = arith.addf %42, %43 : vector<8x32xf32>
    %45 = math.tanh %44 : vector<8x32xf32>
    %46 = arith.mulf %41, %45 : vector<8x32xf32>
    %47 = vector.broadcast %c0_i32 : i32 to vector<8x1xi32>
    %48 = arith.cmpi slt, %47, %14 : vector<8x1xi32>
    %49 = vector.shape_cast %48 : vector<8x1xi1> to vector<8x1xi1>
    %50 = vector.broadcast %49 : vector<8x1xi1> to vector<8x32xi1>
    %51 = arith.select %50, %44, %16 : vector<8x32xi1>, vector<8x32xf32>
    %c0_29 = arith.constant 0 : index
    %c0_30 = arith.constant 0 : index
    %52 = vector.load %arg24[%c0_29, %c0_30] : memref<8x32xf32, #tpu.memory_space<vmem>>, vector<8x32xf32>
    tpu.vector_store %arg24[%c0_29, %c0_30], %51 {strides = array<i32>} : memref<8x32xf32, #tpu.memory_space<vmem>>, vector<8x32xf32>,
    %53 = vector.shape_cast %48 : vector<8x1xi1> to vector<8x1xi1>
    %54 = vector.broadcast %53 : vector<8x1xi1> to vector<8x32xi1>
    %55 = arith.select %54, %46, %15 : vector<8x32xi1>, vector<8x32xf32>
    %c0_31 = arith.constant 0 : index
    %c0_32 = arith.constant 0 : index
    %56 = vector.load %arg23[%c0_31, %c0_32] : memref<8x32xf32, #tpu.memory_space<vmem>>, vector<8x32xf32>
    tpu.vector_store %arg23[%c0_31, %c0_32], %55 {strides = array<i32>} : memref<8x32xf32, #tpu.memory_space<vmem>>, vector<8x32xf32>,
    %c1_i32 = arith.constant 1 : i32
    %c0_33 = arith.constant 0 : index
    %c0_34 = arith.constant 0 : index
    %57 = vector.load %arg23[%c0_33, %c0_34] : memref<8x32xf32, #tpu.memory_space<vmem>>, vector<8x32xf32>
    %c0_35 = arith.constant 0 : index
    %c0_36 = arith.constant 0 : index
    %58 = vector.load %arg24[%c0_35, %c0_36] : memref<8x32xf32, #tpu.memory_space<vmem>>, vector<8x32xf32>
    %59 = arith.index_cast %c1_i32 : i32 to index
    %c0_37 = arith.constant 0 : index
    %c0_38 = arith.constant 0 : index
    %60 = vector.load %arg25[%59, %c0_37, %c0_38] : memref<8x8x128xf32, #tpu.memory_space<vmem>>, vector<1x8x128xf32>
    %61 = vector.shape_cast %60 : vector<1x8x128xf32> to vector<8x128xf32>
    %cst_39 = arith.constant dense<0.000000e+00> : vector<8x128xf32>
    %62 = tpu.matmul %57, %13, %cst_39 {dimension_numbers = #tpu.dot_dimension_numbers<[1], [0], [0], [1], [0, 0, 1, 1], [], []>} : vector<8x32xf32>, vector<32x128xf32>, vector<8x128xf32> -> vector<8x128xf32>
    %63 = arith.addf %61, %62 : vector<8x128xf32>
    %64 = vector.extract_strided_slice %63 {offsets = [0, 0], sizes = [8, 32], strides = [1, 1]} : vector<8x128xf32> to vector<8x32xf32>
    %65 = arith.negf %64 : vector<8x32xf32>
    %66 = math.exp %65 : vector<8x32xf32>
    %cst_40 = arith.constant 1.000000e+00 : f32
    %67 = vector.broadcast %cst_40 : f32 to vector<8x32xf32>
    %68 = arith.addf %67, %66 : vector<8x32xf32>
    %69 = arith.divf %67, %68 : vector<8x32xf32>
    %70 = vector.extract_strided_slice %63 {offsets = [0, 32], sizes = [8, 32], strides = [1, 1]} : vector<8x128xf32> to vector<8x32xf32>
    %71 = arith.negf %70 : vector<8x32xf32>
    %72 = math.exp %71 : vector<8x32xf32>
    %cst_41 = arith.constant 1.000000e+00 : f32
    %73 = vector.broadcast %cst_41 : f32 to vector<8x32xf32>
    %74 = arith.addf %73, %72 : vector<8x32xf32>
    %75 = arith.divf %73, %74 : vector<8x32xf32>
    %76 = vector.extract_strided_slice %63 {offsets = [0, 64], sizes = [8, 32], strides = [1, 1]} : vector<8x128xf32> to vector<8x32xf32>
    %77 = math.tanh %76 : vector<8x32xf32>
    %78 = vector.extract_strided_slice %63 {offsets = [0, 96], sizes = [8, 32], strides = [1, 1]} : vector<8x128xf32> to vector<8x32xf32>
    %79 = arith.negf %78 : vector<8x32xf32>
    %80 = math.exp %79 : vector<8x32xf32>
    %cst_42 = arith.constant 1.000000e+00 : f32
    %81 = vector.broadcast %cst_42 : f32 to vector<8x32xf32>
    %82 = arith.addf %81, %80 : vector<8x32xf32>
    %83 = arith.divf %81, %82 : vector<8x32xf32>
    %84 = arith.mulf %75, %58 : vector<8x32xf32>
    %85 = arith.mulf %69, %77 : vector<8x32xf32>
    %86 = arith.addf %84, %85 : vector<8x32xf32>
    %87 = math.tanh %86 : vector<8x32xf32>
    %88 = arith.mulf %83, %87 : vector<8x32xf32>
    %89 = vector.broadcast %c1_i32 : i32 to vector<8x1xi32>
    %90 = arith.cmpi slt, %89, %14 : vector<8x1xi32>
    %91 = vector.shape_cast %90 : vector<8x1xi1> to vector<8x1xi1>
    %92 = vector.broadcast %91 : vector<8x1xi1> to vector<8x32xi1>
    %93 = arith.select %92, %86, %58 : vector<8x32xi1>, vector<8x32xf32>
    %c0_43 = arith.constant 0 : index
    %c0_44 = arith.constant 0 : index
    %94 = vector.load %arg24[%c0_43, %c0_44] : memref<8x32xf32, #tpu.memory_space<vmem>>, vector<8x32xf32>
    tpu.vector_store %arg24[%c0_43, %c0_44], %93 {strides = array<i32>} : memref<8x32xf32, #tpu.memory_space<vmem>>, vector<8x32xf32>,
    %95 = vector.shape_cast %90 : vector<8x1xi1> to vector<8x1xi1>
    %96 = vector.broadcast %95 : vector<8x1xi1> to vector<8x32xi1>
    %97 = arith.select %96, %88, %57 : vector<8x32xi1>, vector<8x32xf32>
    %c0_45 = arith.constant 0 : index
    %c0_46 = arith.constant 0 : index
    %98 = vector.load %arg23[%c0_45, %c0_46] : memref<8x32xf32, #tpu.memory_space<vmem>>, vector<8x32xf32>
    tpu.vector_store %arg23[%c0_45, %c0_46], %97 {strides = array<i32>} : memref<8x32xf32, #tpu.memory_space<vmem>>, vector<8x32xf32>,
    %c2_i32 = arith.constant 2 : i32
    %c0_47 = arith.constant 0 : index
    %c0_48 = arith.constant 0 : index
    %99 = vector.load %arg23[%c0_47, %c0_48] : memref<8x32xf32, #tpu.memory_space<vmem>>, vector<8x32xf32>
    %c0_49 = arith.constant 0 : index
    %c0_50 = arith.constant 0 : index
    %100 = vector.load %arg24[%c0_49, %c0_50] : memref<8x32xf32, #tpu.memory_space<vmem>>, vector<8x32xf32>
    %101 = arith.index_cast %c2_i32 : i32 to index
    %c0_51 = arith.constant 0 : index
    %c0_52 = arith.constant 0 : index
    %102 = vector.load %arg25[%101, %c0_51, %c0_52] : memref<8x8x128xf32, #tpu.memory_space<vmem>>, vector<1x8x128xf32>
    %103 = vector.shape_cast %102 : vector<1x8x128xf32> to vector<8x128xf32>
    %cst_53 = arith.constant dense<0.000000e+00> : vector<8x128xf32>
    %104 = tpu.matmul %99, %13, %cst_53 {dimension_numbers = #tpu.dot_dimension_numbers<[1], [0], [0], [1], [0, 0, 1, 1], [], []>} : vector<8x32xf32>, vector<32x128xf32>, vector<8x128xf32> -> vector<8x128xf32>
    %105 = arith.addf %103, %104 : vector<8x128xf32>
    %106 = vector.extract_strided_slice %105 {offsets = [0, 0], sizes = [8, 32], strides = [1, 1]} : vector<8x128xf32> to vector<8x32xf32>
    %107 = arith.negf %106 : vector<8x32xf32>
    %108 = math.exp %107 : vector<8x32xf32>
    %cst_54 = arith.constant 1.000000e+00 : f32
    %109 = vector.broadcast %cst_54 : f32 to vector<8x32xf32>
    %110 = arith.addf %109, %108 : vector<8x32xf32>
    %111 = arith.divf %109, %110 : vector<8x32xf32>
    %112 = vector.extract_strided_slice %105 {offsets = [0, 32], sizes = [8, 32], strides = [1, 1]} : vector<8x128xf32> to vector<8x32xf32>
    %113 = arith.negf %112 : vector<8x32xf32>
    %114 = math.exp %113 : vector<8x32xf32>
    %cst_55 = arith.constant 1.000000e+00 : f32
    %115 = vector.broadcast %cst_55 : f32 to vector<8x32xf32>
    %116 = arith.addf %115, %114 : vector<8x32xf32>
    %117 = arith.divf %115, %116 : vector<8x32xf32>
    %118 = vector.extract_strided_slice %105 {offsets = [0, 64], sizes = [8, 32], strides = [1, 1]} : vector<8x128xf32> to vector<8x32xf32>
    %119 = math.tanh %118 : vector<8x32xf32>
    %120 = vector.extract_strided_slice %105 {offsets = [0, 96], sizes = [8, 32], strides = [1, 1]} : vector<8x128xf32> to vector<8x32xf32>
    %121 = arith.negf %120 : vector<8x32xf32>
    %122 = math.exp %121 : vector<8x32xf32>
    %cst_56 = arith.constant 1.000000e+00 : f32
    %123 = vector.broadcast %cst_56 : f32 to vector<8x32xf32>
    %124 = arith.addf %123, %122 : vector<8x32xf32>
    %125 = arith.divf %123, %124 : vector<8x32xf32>
    %126 = arith.mulf %117, %100 : vector<8x32xf32>
    %127 = arith.mulf %111, %119 : vector<8x32xf32>
    %128 = arith.addf %126, %127 : vector<8x32xf32>
    %129 = math.tanh %128 : vector<8x32xf32>
    %130 = arith.mulf %125, %129 : vector<8x32xf32>
    %131 = vector.broadcast %c2_i32 : i32 to vector<8x1xi32>
    %132 = arith.cmpi slt, %131, %14 : vector<8x1xi32>
    %133 = vector.shape_cast %132 : vector<8x1xi1> to vector<8x1xi1>
    %134 = vector.broadcast %133 : vector<8x1xi1> to vector<8x32xi1>
    %135 = arith.select %134, %128, %100 : vector<8x32xi1>, vector<8x32xf32>
    %c0_57 = arith.constant 0 : index
    %c0_58 = arith.constant 0 : index
    %136 = vector.load %arg24[%c0_57, %c0_58] : memref<8x32xf32, #tpu.memory_space<vmem>>, vector<8x32xf32>
    tpu.vector_store %arg24[%c0_57, %c0_58], %135 {strides = array<i32>} : memref<8x32xf32, #tpu.memory_space<vmem>>, vector<8x32xf32>,
    %137 = vector.shape_cast %132 : vector<8x1xi1> to vector<8x1xi1>
    %138 = vector.broadcast %137 : vector<8x1xi1> to vector<8x32xi1>
    %139 = arith.select %138, %130, %99 : vector<8x32xi1>, vector<8x32xf32>
    %c0_59 = arith.constant 0 : index
    %c0_60 = arith.constant 0 : index
    %140 = vector.load %arg23[%c0_59, %c0_60] : memref<8x32xf32, #tpu.memory_space<vmem>>, vector<8x32xf32>
    tpu.vector_store %arg23[%c0_59, %c0_60], %139 {strides = array<i32>} : memref<8x32xf32, #tpu.memory_space<vmem>>, vector<8x32xf32>,
    %c3_i32 = arith.constant 3 : i32
    %c0_61 = arith.constant 0 : index
    %c0_62 = arith.constant 0 : index
    %141 = vector.load %arg23[%c0_61, %c0_62] : memref<8x32xf32, #tpu.memory_space<vmem>>, vector<8x32xf32>
    %c0_63 = arith.constant 0 : index
    %c0_64 = arith.constant 0 : index
    %142 = vector.load %arg24[%c0_63, %c0_64] : memref<8x32xf32, #tpu.memory_space<vmem>>, vector<8x32xf32>
    %143 = arith.index_cast %c3_i32 : i32 to index
    %c0_65 = arith.constant 0 : index
    %c0_66 = arith.constant 0 : index
    %144 = vector.load %arg25[%143, %c0_65, %c0_66] : memref<8x8x128xf32, #tpu.memory_space<vmem>>, vector<1x8x128xf32>
    %145 = vector.shape_cast %144 : vector<1x8x128xf32> to vector<8x128xf32>
    %cst_67 = arith.constant dense<0.000000e+00> : vector<8x128xf32>
    %146 = tpu.matmul %141, %13, %cst_67 {dimension_numbers = #tpu.dot_dimension_numbers<[1], [0], [0], [1], [0, 0, 1, 1], [], []>} : vector<8x32xf32>, vector<32x128xf32>, vector<8x128xf32> -> vector<8x128xf32>
    %147 = arith.addf %145, %146 : vector<8x128xf32>
    %148 = vector.extract_strided_slice %147 {offsets = [0, 0], sizes = [8, 32], strides = [1, 1]} : vector<8x128xf32> to vector<8x32xf32>
    %149 = arith.negf %148 : vector<8x32xf32>
    %150 = math.exp %149 : vector<8x32xf32>
    %cst_68 = arith.constant 1.000000e+00 : f32
    %151 = vector.broadcast %cst_68 : f32 to vector<8x32xf32>
    %152 = arith.addf %151, %150 : vector<8x32xf32>
    %153 = arith.divf %151, %152 : vector<8x32xf32>
    %154 = vector.extract_strided_slice %147 {offsets = [0, 32], sizes = [8, 32], strides = [1, 1]} : vector<8x128xf32> to vector<8x32xf32>
    %155 = arith.negf %154 : vector<8x32xf32>
    %156 = math.exp %155 : vector<8x32xf32>
    %cst_69 = arith.constant 1.000000e+00 : f32
    %157 = vector.broadcast %cst_69 : f32 to vector<8x32xf32>
    %158 = arith.addf %157, %156 : vector<8x32xf32>
    %159 = arith.divf %157, %158 : vector<8x32xf32>
    %160 = vector.extract_strided_slice %147 {offsets = [0, 64], sizes = [8, 32], strides = [1, 1]} : vector<8x128xf32> to vector<8x32xf32>
    %161 = math.tanh %160 : vector<8x32xf32>
    %162 = vector.extract_strided_slice %147 {offsets = [0, 96], sizes = [8, 32], strides = [1, 1]} : vector<8x128xf32> to vector<8x32xf32>
    %163 = arith.negf %162 : vector<8x32xf32>
    %164 = math.exp %163 : vector<8x32xf32>
    %cst_70 = arith.constant 1.000000e+00 : f32
    %165 = vector.broadcast %cst_70 : f32 to vector<8x32xf32>
    %166 = arith.addf %165, %164 : vector<8x32xf32>
    %167 = arith.divf %165, %166 : vector<8x32xf32>
    %168 = arith.mulf %159, %142 : vector<8x32xf32>
    %169 = arith.mulf %153, %161 : vector<8x32xf32>
    %170 = arith.addf %168, %169 : vector<8x32xf32>
    %171 = math.tanh %170 : vector<8x32xf32>
    %172 = arith.mulf %167, %171 : vector<8x32xf32>
    %173 = vector.broadcast %c3_i32 : i32 to vector<8x1xi32>
    %174 = arith.cmpi slt, %173, %14 : vector<8x1xi32>
    %175 = vector.shape_cast %174 : vector<8x1xi1> to vector<8x1xi1>
    %176 = vector.broadcast %175 : vector<8x1xi1> to vector<8x32xi1>
    %177 = arith.select %176, %170, %142 : vector<8x32xi1>, vector<8x32xf32>
    %c0_71 = arith.constant 0 : index
    %c0_72 = arith.constant 0 : index
    %178 = vector.load %arg24[%c0_71, %c0_72] : memref<8x32xf32, #tpu.memory_space<vmem>>, vector<8x32xf32>
    tpu.vector_store %arg24[%c0_71, %c0_72], %177 {strides = array<i32>} : memref<8x32xf32, #tpu.memory_space<vmem>>, vector<8x32xf32>,
    %179 = vector.shape_cast %174 : vector<8x1xi1> to vector<8x1xi1>
    %180 = vector.broadcast %179 : vector<8x1xi1> to vector<8x32xi1>
    %181 = arith.select %180, %172, %141 : vector<8x32xi1>, vector<8x32xf32>
    %c0_73 = arith.constant 0 : index
    %c0_74 = arith.constant 0 : index
    %182 = vector.load %arg23[%c0_73, %c0_74] : memref<8x32xf32, #tpu.memory_space<vmem>>, vector<8x32xf32>
    tpu.vector_store %arg23[%c0_73, %c0_74], %181 {strides = array<i32>} : memref<8x32xf32, #tpu.memory_space<vmem>>, vector<8x32xf32>,
    %c4_i32 = arith.constant 4 : i32
    %c0_75 = arith.constant 0 : index
    %c0_76 = arith.constant 0 : index
    %183 = vector.load %arg23[%c0_75, %c0_76] : memref<8x32xf32, #tpu.memory_space<vmem>>, vector<8x32xf32>
    %c0_77 = arith.constant 0 : index
    %c0_78 = arith.constant 0 : index
    %184 = vector.load %arg24[%c0_77, %c0_78] : memref<8x32xf32, #tpu.memory_space<vmem>>, vector<8x32xf32>
    %185 = arith.index_cast %c4_i32 : i32 to index
    %c0_79 = arith.constant 0 : index
    %c0_80 = arith.constant 0 : index
    %186 = vector.load %arg25[%185, %c0_79, %c0_80] : memref<8x8x128xf32, #tpu.memory_space<vmem>>, vector<1x8x128xf32>
    %187 = vector.shape_cast %186 : vector<1x8x128xf32> to vector<8x128xf32>
    %cst_81 = arith.constant dense<0.000000e+00> : vector<8x128xf32>
    %188 = tpu.matmul %183, %13, %cst_81 {dimension_numbers = #tpu.dot_dimension_numbers<[1], [0], [0], [1], [0, 0, 1, 1], [], []>} : vector<8x32xf32>, vector<32x128xf32>, vector<8x128xf32> -> vector<8x128xf32>
    %189 = arith.addf %187, %188 : vector<8x128xf32>
    %190 = vector.extract_strided_slice %189 {offsets = [0, 0], sizes = [8, 32], strides = [1, 1]} : vector<8x128xf32> to vector<8x32xf32>
    %191 = arith.negf %190 : vector<8x32xf32>
    %192 = math.exp %191 : vector<8x32xf32>
    %cst_82 = arith.constant 1.000000e+00 : f32
    %193 = vector.broadcast %cst_82 : f32 to vector<8x32xf32>
    %194 = arith.addf %193, %192 : vector<8x32xf32>
    %195 = arith.divf %193, %194 : vector<8x32xf32>
    %196 = vector.extract_strided_slice %189 {offsets = [0, 32], sizes = [8, 32], strides = [1, 1]} : vector<8x128xf32> to vector<8x32xf32>
    %197 = arith.negf %196 : vector<8x32xf32>
    %198 = math.exp %197 : vector<8x32xf32>
    %cst_83 = arith.constant 1.000000e+00 : f32
    %199 = vector.broadcast %cst_83 : f32 to vector<8x32xf32>
    %200 = arith.addf %199, %198 : vector<8x32xf32>
    %201 = arith.divf %199, %200 : vector<8x32xf32>
    %202 = vector.extract_strided_slice %189 {offsets = [0, 64], sizes = [8, 32], strides = [1, 1]} : vector<8x128xf32> to vector<8x32xf32>
    %203 = math.tanh %202 : vector<8x32xf32>
    %204 = vector.extract_strided_slice %189 {offsets = [0, 96], sizes = [8, 32], strides = [1, 1]} : vector<8x128xf32> to vector<8x32xf32>
    %205 = arith.negf %204 : vector<8x32xf32>
    %206 = math.exp %205 : vector<8x32xf32>
    %cst_84 = arith.constant 1.000000e+00 : f32
    %207 = vector.broadcast %cst_84 : f32 to vector<8x32xf32>
    %208 = arith.addf %207, %206 : vector<8x32xf32>
    %209 = arith.divf %207, %208 : vector<8x32xf32>
    %210 = arith.mulf %201, %184 : vector<8x32xf32>
    %211 = arith.mulf %195, %203 : vector<8x32xf32>
    %212 = arith.addf %210, %211 : vector<8x32xf32>
    %213 = math.tanh %212 : vector<8x32xf32>
    %214 = arith.mulf %209, %213 : vector<8x32xf32>
    %215 = vector.broadcast %c4_i32 : i32 to vector<8x1xi32>
    %216 = arith.cmpi slt, %215, %14 : vector<8x1xi32>
    %217 = vector.shape_cast %216 : vector<8x1xi1> to vector<8x1xi1>
    %218 = vector.broadcast %217 : vector<8x1xi1> to vector<8x32xi1>
    %219 = arith.select %218, %212, %184 : vector<8x32xi1>, vector<8x32xf32>
    %c0_85 = arith.constant 0 : index
    %c0_86 = arith.constant 0 : index
    %220 = vector.load %arg24[%c0_85, %c0_86] : memref<8x32xf32, #tpu.memory_space<vmem>>, vector<8x32xf32>
    tpu.vector_store %arg24[%c0_85, %c0_86], %219 {strides = array<i32>} : memref<8x32xf32, #tpu.memory_space<vmem>>, vector<8x32xf32>,
    %221 = vector.shape_cast %216 : vector<8x1xi1> to vector<8x1xi1>
    %222 = vector.broadcast %221 : vector<8x1xi1> to vector<8x32xi1>
    %223 = arith.select %222, %214, %183 : vector<8x32xi1>, vector<8x32xf32>
    %c0_87 = arith.constant 0 : index
    %c0_88 = arith.constant 0 : index
    %224 = vector.load %arg23[%c0_87, %c0_88] : memref<8x32xf32, #tpu.memory_space<vmem>>, vector<8x32xf32>
    tpu.vector_store %arg23[%c0_87, %c0_88], %223 {strides = array<i32>} : memref<8x32xf32, #tpu.memory_space<vmem>>, vector<8x32xf32>,
    %c5_i32 = arith.constant 5 : i32
    %c0_89 = arith.constant 0 : index
    %c0_90 = arith.constant 0 : index
    %225 = vector.load %arg23[%c0_89, %c0_90] : memref<8x32xf32, #tpu.memory_space<vmem>>, vector<8x32xf32>
    %c0_91 = arith.constant 0 : index
    %c0_92 = arith.constant 0 : index
    %226 = vector.load %arg24[%c0_91, %c0_92] : memref<8x32xf32, #tpu.memory_space<vmem>>, vector<8x32xf32>
    %227 = arith.index_cast %c5_i32 : i32 to index
    %c0_93 = arith.constant 0 : index
    %c0_94 = arith.constant 0 : index
    %228 = vector.load %arg25[%227, %c0_93, %c0_94] : memref<8x8x128xf32, #tpu.memory_space<vmem>>, vector<1x8x128xf32>
    %229 = vector.shape_cast %228 : vector<1x8x128xf32> to vector<8x128xf32>
    %cst_95 = arith.constant dense<0.000000e+00> : vector<8x128xf32>
    %230 = tpu.matmul %225, %13, %cst_95 {dimension_numbers = #tpu.dot_dimension_numbers<[1], [0], [0], [1], [0, 0, 1, 1], [], []>} : vector<8x32xf32>, vector<32x128xf32>, vector<8x128xf32> -> vector<8x128xf32>
    %231 = arith.addf %229, %230 : vector<8x128xf32>
    %232 = vector.extract_strided_slice %231 {offsets = [0, 0], sizes = [8, 32], strides = [1, 1]} : vector<8x128xf32> to vector<8x32xf32>
    %233 = arith.negf %232 : vector<8x32xf32>
    %234 = math.exp %233 : vector<8x32xf32>
    %cst_96 = arith.constant 1.000000e+00 : f32
    %235 = vector.broadcast %cst_96 : f32 to vector<8x32xf32>
    %236 = arith.addf %235, %234 : vector<8x32xf32>
    %237 = arith.divf %235, %236 : vector<8x32xf32>
    %238 = vector.extract_strided_slice %231 {offsets = [0, 32], sizes = [8, 32], strides = [1, 1]} : vector<8x128xf32> to vector<8x32xf32>
    %239 = arith.negf %238 : vector<8x32xf32>
    %240 = math.exp %239 : vector<8x32xf32>
    %cst_97 = arith.constant 1.000000e+00 : f32
    %241 = vector.broadcast %cst_97 : f32 to vector<8x32xf32>
    %242 = arith.addf %241, %240 : vector<8x32xf32>
    %243 = arith.divf %241, %242 : vector<8x32xf32>
    %244 = vector.extract_strided_slice %231 {offsets = [0, 64], sizes = [8, 32], strides = [1, 1]} : vector<8x128xf32> to vector<8x32xf32>
    %245 = math.tanh %244 : vector<8x32xf32>
    %246 = vector.extract_strided_slice %231 {offsets = [0, 96], sizes = [8, 32], strides = [1, 1]} : vector<8x128xf32> to vector<8x32xf32>
    %247 = arith.negf %246 : vector<8x32xf32>
    %248 = math.exp %247 : vector<8x32xf32>
    %cst_98 = arith.constant 1.000000e+00 : f32
    %249 = vector.broadcast %cst_98 : f32 to vector<8x32xf32>
    %250 = arith.addf %249, %248 : vector<8x32xf32>
    %251 = arith.divf %249, %250 : vector<8x32xf32>
    %252 = arith.mulf %243, %226 : vector<8x32xf32>
    %253 = arith.mulf %237, %245 : vector<8x32xf32>
    %254 = arith.addf %252, %253 : vector<8x32xf32>
    %255 = math.tanh %254 : vector<8x32xf32>
    %256 = arith.mulf %251, %255 : vector<8x32xf32>
    %257 = vector.broadcast %c5_i32 : i32 to vector<8x1xi32>
    %258 = arith.cmpi slt, %257, %14 : vector<8x1xi32>
    %259 = vector.shape_cast %258 : vector<8x1xi1> to vector<8x1xi1>
    %260 = vector.broadcast %259 : vector<8x1xi1> to vector<8x32xi1>
    %261 = arith.select %260, %254, %226 : vector<8x32xi1>, vector<8x32xf32>
    %c0_99 = arith.constant 0 : index
    %c0_100 = arith.constant 0 : index
    %262 = vector.load %arg24[%c0_99, %c0_100] : memref<8x32xf32, #tpu.memory_space<vmem>>, vector<8x32xf32>
    tpu.vector_store %arg24[%c0_99, %c0_100], %261 {strides = array<i32>} : memref<8x32xf32, #tpu.memory_space<vmem>>, vector<8x32xf32>,
    %263 = vector.shape_cast %258 : vector<8x1xi1> to vector<8x1xi1>
    %264 = vector.broadcast %263 : vector<8x1xi1> to vector<8x32xi1>
    %265 = arith.select %264, %256, %225 : vector<8x32xi1>, vector<8x32xf32>
    %c0_101 = arith.constant 0 : index
    %c0_102 = arith.constant 0 : index
    %266 = vector.load %arg23[%c0_101, %c0_102] : memref<8x32xf32, #tpu.memory_space<vmem>>, vector<8x32xf32>
    tpu.vector_store %arg23[%c0_101, %c0_102], %265 {strides = array<i32>} : memref<8x32xf32, #tpu.memory_space<vmem>>, vector<8x32xf32>,
    %c6_i32 = arith.constant 6 : i32
    %c0_103 = arith.constant 0 : index
    %c0_104 = arith.constant 0 : index
    %267 = vector.load %arg23[%c0_103, %c0_104] : memref<8x32xf32, #tpu.memory_space<vmem>>, vector<8x32xf32>
    %c0_105 = arith.constant 0 : index
    %c0_106 = arith.constant 0 : index
    %268 = vector.load %arg24[%c0_105, %c0_106] : memref<8x32xf32, #tpu.memory_space<vmem>>, vector<8x32xf32>
    %269 = arith.index_cast %c6_i32 : i32 to index
    %c0_107 = arith.constant 0 : index
    %c0_108 = arith.constant 0 : index
    %270 = vector.load %arg25[%269, %c0_107, %c0_108] : memref<8x8x128xf32, #tpu.memory_space<vmem>>, vector<1x8x128xf32>
    %271 = vector.shape_cast %270 : vector<1x8x128xf32> to vector<8x128xf32>
    %cst_109 = arith.constant dense<0.000000e+00> : vector<8x128xf32>
    %272 = tpu.matmul %267, %13, %cst_109 {dimension_numbers = #tpu.dot_dimension_numbers<[1], [0], [0], [1], [0, 0, 1, 1], [], []>} : vector<8x32xf32>, vector<32x128xf32>, vector<8x128xf32> -> vector<8x128xf32>
    %273 = arith.addf %271, %272 : vector<8x128xf32>
    %274 = vector.extract_strided_slice %273 {offsets = [0, 0], sizes = [8, 32], strides = [1, 1]} : vector<8x128xf32> to vector<8x32xf32>
    %275 = arith.negf %274 : vector<8x32xf32>
    %276 = math.exp %275 : vector<8x32xf32>
    %cst_110 = arith.constant 1.000000e+00 : f32
    %277 = vector.broadcast %cst_110 : f32 to vector<8x32xf32>
    %278 = arith.addf %277, %276 : vector<8x32xf32>
    %279 = arith.divf %277, %278 : vector<8x32xf32>
    %280 = vector.extract_strided_slice %273 {offsets = [0, 32], sizes = [8, 32], strides = [1, 1]} : vector<8x128xf32> to vector<8x32xf32>
    %281 = arith.negf %280 : vector<8x32xf32>
    %282 = math.exp %281 : vector<8x32xf32>
    %cst_111 = arith.constant 1.000000e+00 : f32
    %283 = vector.broadcast %cst_111 : f32 to vector<8x32xf32>
    %284 = arith.addf %283, %282 : vector<8x32xf32>
    %285 = arith.divf %283, %284 : vector<8x32xf32>
    %286 = vector.extract_strided_slice %273 {offsets = [0, 64], sizes = [8, 32], strides = [1, 1]} : vector<8x128xf32> to vector<8x32xf32>
    %287 = math.tanh %286 : vector<8x32xf32>
    %288 = vector.extract_strided_slice %273 {offsets = [0, 96], sizes = [8, 32], strides = [1, 1]} : vector<8x128xf32> to vector<8x32xf32>
    %289 = arith.negf %288 : vector<8x32xf32>
    %290 = math.exp %289 : vector<8x32xf32>
    %cst_112 = arith.constant 1.000000e+00 : f32
    %291 = vector.broadcast %cst_112 : f32 to vector<8x32xf32>
    %292 = arith.addf %291, %290 : vector<8x32xf32>
    %293 = arith.divf %291, %292 : vector<8x32xf32>
    %294 = arith.mulf %285, %268 : vector<8x32xf32>
    %295 = arith.mulf %279, %287 : vector<8x32xf32>
    %296 = arith.addf %294, %295 : vector<8x32xf32>
    %297 = math.tanh %296 : vector<8x32xf32>
    %298 = arith.mulf %293, %297 : vector<8x32xf32>
    %299 = vector.broadcast %c6_i32 : i32 to vector<8x1xi32>
    %300 = arith.cmpi slt, %299, %14 : vector<8x1xi32>
    %301 = vector.shape_cast %300 : vector<8x1xi1> to vector<8x1xi1>
    %302 = vector.broadcast %301 : vector<8x1xi1> to vector<8x32xi1>
    %303 = arith.select %302, %296, %268 : vector<8x32xi1>, vector<8x32xf32>
    %c0_113 = arith.constant 0 : index
    %c0_114 = arith.constant 0 : index
    %304 = vector.load %arg24[%c0_113, %c0_114] : memref<8x32xf32, #tpu.memory_space<vmem>>, vector<8x32xf32>
    tpu.vector_store %arg24[%c0_113, %c0_114], %303 {strides = array<i32>} : memref<8x32xf32, #tpu.memory_space<vmem>>, vector<8x32xf32>,
    %305 = vector.shape_cast %300 : vector<8x1xi1> to vector<8x1xi1>
    %306 = vector.broadcast %305 : vector<8x1xi1> to vector<8x32xi1>
    %307 = arith.select %306, %298, %267 : vector<8x32xi1>, vector<8x32xf32>
    %c0_115 = arith.constant 0 : index
    %c0_116 = arith.constant 0 : index
    %308 = vector.load %arg23[%c0_115, %c0_116] : memref<8x32xf32, #tpu.memory_space<vmem>>, vector<8x32xf32>
    tpu.vector_store %arg23[%c0_115, %c0_116], %307 {strides = array<i32>} : memref<8x32xf32, #tpu.memory_space<vmem>>, vector<8x32xf32>,
    %c7_i32 = arith.constant 7 : i32
    %c0_117 = arith.constant 0 : index
    %c0_118 = arith.constant 0 : index
    %309 = vector.load %arg23[%c0_117, %c0_118] : memref<8x32xf32, #tpu.memory_space<vmem>>, vector<8x32xf32>
    %c0_119 = arith.constant 0 : index
    %c0_120 = arith.constant 0 : index
    %310 = vector.load %arg24[%c0_119, %c0_120] : memref<8x32xf32, #tpu.memory_space<vmem>>, vector<8x32xf32>
    %311 = arith.index_cast %c7_i32 : i32 to index
    %c0_121 = arith.constant 0 : index
    %c0_122 = arith.constant 0 : index
    %312 = vector.load %arg25[%311, %c0_121, %c0_122] : memref<8x8x128xf32, #tpu.memory_space<vmem>>, vector<1x8x128xf32>
    %313 = vector.shape_cast %312 : vector<1x8x128xf32> to vector<8x128xf32>
    %cst_123 = arith.constant dense<0.000000e+00> : vector<8x128xf32>
    %314 = tpu.matmul %309, %13, %cst_123 {dimension_numbers = #tpu.dot_dimension_numbers<[1], [0], [0], [1], [0, 0, 1, 1], [], []>} : vector<8x32xf32>, vector<32x128xf32>, vector<8x128xf32> -> vector<8x128xf32>
    %315 = arith.addf %313, %314 : vector<8x128xf32>
    %316 = vector.extract_strided_slice %315 {offsets = [0, 0], sizes = [8, 32], strides = [1, 1]} : vector<8x128xf32> to vector<8x32xf32>
    %317 = arith.negf %316 : vector<8x32xf32>
    %318 = math.exp %317 : vector<8x32xf32>
    %cst_124 = arith.constant 1.000000e+00 : f32
    %319 = vector.broadcast %cst_124 : f32 to vector<8x32xf32>
    %320 = arith.addf %319, %318 : vector<8x32xf32>
    %321 = arith.divf %319, %320 : vector<8x32xf32>
    %322 = vector.extract_strided_slice %315 {offsets = [0, 32], sizes = [8, 32], strides = [1, 1]} : vector<8x128xf32> to vector<8x32xf32>
    %323 = arith.negf %322 : vector<8x32xf32>
    %324 = math.exp %323 : vector<8x32xf32>
    %cst_125 = arith.constant 1.000000e+00 : f32
    %325 = vector.broadcast %cst_125 : f32 to vector<8x32xf32>
    %326 = arith.addf %325, %324 : vector<8x32xf32>
    %327 = arith.divf %325, %326 : vector<8x32xf32>
    %328 = vector.extract_strided_slice %315 {offsets = [0, 64], sizes = [8, 32], strides = [1, 1]} : vector<8x128xf32> to vector<8x32xf32>
    %329 = math.tanh %328 : vector<8x32xf32>
    %330 = vector.extract_strided_slice %315 {offsets = [0, 96], sizes = [8, 32], strides = [1, 1]} : vector<8x128xf32> to vector<8x32xf32>
    %331 = arith.negf %330 : vector<8x32xf32>
    %332 = math.exp %331 : vector<8x32xf32>
    %cst_126 = arith.constant 1.000000e+00 : f32
    %333 = vector.broadcast %cst_126 : f32 to vector<8x32xf32>
    %334 = arith.addf %333, %332 : vector<8x32xf32>
    %335 = arith.divf %333, %334 : vector<8x32xf32>
    %336 = arith.mulf %327, %310 : vector<8x32xf32>
    %337 = arith.mulf %321, %329 : vector<8x32xf32>
    %338 = arith.addf %336, %337 : vector<8x32xf32>
    %339 = math.tanh %338 : vector<8x32xf32>
    %340 = arith.mulf %335, %339 : vector<8x32xf32>
    %341 = vector.broadcast %c7_i32 : i32 to vector<8x1xi32>
    %342 = arith.cmpi slt, %341, %14 : vector<8x1xi32>
    %343 = vector.shape_cast %342 : vector<8x1xi1> to vector<8x1xi1>
    %344 = vector.broadcast %343 : vector<8x1xi1> to vector<8x32xi1>
    %345 = arith.select %344, %338, %310 : vector<8x32xi1>, vector<8x32xf32>
    %c0_127 = arith.constant 0 : index
    %c0_128 = arith.constant 0 : index
    %346 = vector.load %arg24[%c0_127, %c0_128] : memref<8x32xf32, #tpu.memory_space<vmem>>, vector<8x32xf32>
    tpu.vector_store %arg24[%c0_127, %c0_128], %345 {strides = array<i32>} : memref<8x32xf32, #tpu.memory_space<vmem>>, vector<8x32xf32>,
    %347 = vector.shape_cast %342 : vector<8x1xi1> to vector<8x1xi1>
    %348 = vector.broadcast %347 : vector<8x1xi1> to vector<8x32xi1>
    %349 = arith.select %348, %340, %309 : vector<8x32xi1>, vector<8x32xf32>
    %c0_129 = arith.constant 0 : index
    %c0_130 = arith.constant 0 : index
    %350 = vector.load %arg23[%c0_129, %c0_130] : memref<8x32xf32, #tpu.memory_space<vmem>>, vector<8x32xf32>
    tpu.vector_store %arg23[%c0_129, %c0_130], %349 {strides = array<i32>} : memref<8x32xf32, #tpu.memory_space<vmem>>, vector<8x32xf32>,
    %c8_i32 = arith.constant 8 : i32
    %c0_131 = arith.constant 0 : index
    %c0_132 = arith.constant 0 : index
    %351 = vector.load %arg23[%c0_131, %c0_132] : memref<8x32xf32, #tpu.memory_space<vmem>>, vector<8x32xf32>
    %c0_133 = arith.constant 0 : index
    %c0_134 = arith.constant 0 : index
    %352 = vector.load %arg6[%c0_133, %c0_134] : memref<32x16xf32, #tpu.memory_space<vmem>>, vector<32x16xf32>
    %cst_135 = arith.constant dense<0.000000e+00> : vector<8x16xf32>
    %353 = tpu.matmul %351, %352, %cst_135 {dimension_numbers = #tpu.dot_dimension_numbers<[1], [0], [0], [1], [0, 0, 1, 1], [], []>} : vector<8x32xf32>, vector<32x16xf32>, vector<8x16xf32> -> vector<8x16xf32>
    %c0_136 = arith.constant 0 : index
    %c0_137 = arith.constant 0 : index
    %354 = vector.load %arg7[%c0_136, %c0_137] : memref<1x16xf32, #tpu.memory_space<vmem>>, vector<1x16xf32>
    %355 = vector.broadcast %354 : vector<1x16xf32> to vector<8x16xf32>
    %356 = arith.addf %353, %355 : vector<8x16xf32>
    %c0_138 = arith.constant 0 : index
    %c0_139 = arith.constant 0 : index
    %357 = vector.load %arg8[%c0_138, %c0_139] : memref<32x16xf32, #tpu.memory_space<vmem>>, vector<32x16xf32>
    %cst_140 = arith.constant dense<0.000000e+00> : vector<8x16xf32>
    %358 = tpu.matmul %351, %357, %cst_140 {dimension_numbers = #tpu.dot_dimension_numbers<[1], [0], [0], [1], [0, 0, 1, 1], [], []>} : vector<8x32xf32>, vector<32x16xf32>, vector<8x16xf32> -> vector<8x16xf32>
    %c0_141 = arith.constant 0 : index
    %c0_142 = arith.constant 0 : index
    %359 = vector.load %arg9[%c0_141, %c0_142] : memref<1x16xf32, #tpu.memory_space<vmem>>, vector<1x16xf32>
    %360 = vector.broadcast %359 : vector<1x16xf32> to vector<8x16xf32>
    %361 = arith.addf %358, %360 : vector<8x16xf32>
    %c0_143 = arith.constant 0 : index
    %c0_144 = arith.constant 0 : index
    %362 = vector.load %arg10[%c0_143, %c0_144] : memref<16x32xf32, #tpu.memory_space<vmem>>, vector<16x32xf32>
    %cst_145 = arith.constant dense<0.000000e+00> : vector<8x32xf32>
    %363 = tpu.matmul %361, %362, %cst_145 {dimension_numbers = #tpu.dot_dimension_numbers<[1], [0], [0], [1], [0, 0, 1, 1], [], []>} : vector<8x16xf32>, vector<16x32xf32>, vector<8x32xf32> -> vector<8x32xf32>
    %c0_146 = arith.constant 0 : index
    %c0_147 = arith.constant 0 : index
    %364 = vector.load %arg11[%c0_146, %c0_147] : memref<1x32xf32, #tpu.memory_space<vmem>>, vector<1x32xf32>
    %365 = vector.broadcast %364 : vector<1x32xf32> to vector<8x32xf32>
    %366 = arith.addf %363, %365 : vector<8x32xf32>
    %cst_148 = arith.constant 0.000000e+00 : f32
    %367 = vector.broadcast %cst_148 : f32 to vector<8x32xf32>
    %368 = arith.maximumf %366, %367 : vector<8x32xf32>
    %c0_149 = arith.constant 0 : index
    %c0_150 = arith.constant 0 : index
    %369 = vector.load %arg12[%c0_149, %c0_150] : memref<32x2xf32, #tpu.memory_space<vmem>>, vector<32x2xf32>
    %cst_151 = arith.constant dense<0.000000e+00> : vector<8x2xf32>
    %370 = tpu.matmul %368, %369, %cst_151 {dimension_numbers = #tpu.dot_dimension_numbers<[1], [0], [0], [1], [0, 0, 1, 1], [], []>} : vector<8x32xf32>, vector<32x2xf32>, vector<8x2xf32> -> vector<8x2xf32>
    %c0_152 = arith.constant 0 : index
    %c0_153 = arith.constant 0 : index
    %371 = vector.load %arg13[%c0_152, %c0_153] : memref<1x2xf32, #tpu.memory_space<vmem>>, vector<1x2xf32>
    %372 = vector.broadcast %371 : vector<1x2xf32> to vector<8x2xf32>
    %373 = arith.addf %370, %372 : vector<8x2xf32>
    %c0_154 = arith.constant 0 : index
    %c0_155 = arith.constant 0 : index
    %374 = vector.load %arg14[%c0_154, %c0_155] : memref<16x32xf32, #tpu.memory_space<vmem>>, vector<16x32xf32>
    %cst_156 = arith.constant dense<0.000000e+00> : vector<8x32xf32>
    %375 = tpu.matmul %356, %374, %cst_156 {dimension_numbers = #tpu.dot_dimension_numbers<[1], [0], [0], [1], [0, 0, 1, 1], [], []>} : vector<8x16xf32>, vector<16x32xf32>, vector<8x32xf32> -> vector<8x32xf32>
    %c0_157 = arith.constant 0 : index
    %c0_158 = arith.constant 0 : index
    %376 = vector.load %arg15[%c0_157, %c0_158] : memref<1x32xf32, #tpu.memory_space<vmem>>, vector<1x32xf32>
    %377 = vector.broadcast %376 : vector<1x32xf32> to vector<8x32xf32>
    %378 = arith.addf %375, %377 : vector<8x32xf32>
    %cst_159 = arith.constant 0.000000e+00 : f32
    %379 = vector.broadcast %cst_159 : f32 to vector<8x32xf32>
    %380 = arith.maximumf %378, %379 : vector<8x32xf32>
    %c0_160 = arith.constant 0 : index
    %c0_161 = arith.constant 0 : index
    %381 = vector.load %arg16[%c0_160, %c0_161] : memref<32x2xf32, #tpu.memory_space<vmem>>, vector<32x2xf32>
    %cst_162 = arith.constant dense<0.000000e+00> : vector<8x2xf32>
    %382 = tpu.matmul %380, %381, %cst_162 {dimension_numbers = #tpu.dot_dimension_numbers<[1], [0], [0], [1], [0, 0, 1, 1], [], []>} : vector<8x32xf32>, vector<32x2xf32>, vector<8x2xf32> -> vector<8x2xf32>
    %c0_163 = arith.constant 0 : index
    %c0_164 = arith.constant 0 : index
    %383 = vector.load %arg17[%c0_163, %c0_164] : memref<1x2xf32, #tpu.memory_space<vmem>>, vector<1x2xf32>
    %384 = vector.broadcast %383 : vector<1x2xf32> to vector<8x2xf32>
    %385 = arith.addf %382, %384 : vector<8x2xf32>
    %c0_165 = arith.constant 0 : index
    %c0_166 = arith.constant 0 : index
    %386 = vector.load %arg18[%c0_165, %c0_166] : memref<8x16xf32, #tpu.memory_space<vmem>>, vector<8x16xf32>
    tpu.vector_store %arg18[%c0_165, %c0_166], %356 {strides = array<i32>} : memref<8x16xf32, #tpu.memory_space<vmem>>, vector<8x16xf32>,
    %c0_167 = arith.constant 0 : index
    %c0_168 = arith.constant 0 : index
    %387 = vector.load %arg19[%c0_167, %c0_168] : memref<8x16xf32, #tpu.memory_space<vmem>>, vector<8x16xf32>
    tpu.vector_store %arg19[%c0_167, %c0_168], %361 {strides = array<i32>} : memref<8x16xf32, #tpu.memory_space<vmem>>, vector<8x16xf32>,
    %c0_169 = arith.constant 0 : index
    %c0_170 = arith.constant 0 : index
    %388 = vector.load %arg20[%c0_169, %c0_170] : memref<8x2xf32, #tpu.memory_space<vmem>>, vector<8x2xf32>
    tpu.vector_store %arg20[%c0_169, %c0_170], %373 {strides = array<i32>} : memref<8x2xf32, #tpu.memory_space<vmem>>, vector<8x2xf32>,
    %c0_171 = arith.constant 0 : index
    %c0_172 = arith.constant 0 : index
    %389 = vector.load %arg21[%c0_171, %c0_172] : memref<8x2xf32, #tpu.memory_space<vmem>>, vector<8x2xf32>
    tpu.vector_store %arg21[%c0_171, %c0_172], %385 {strides = array<i32>} : memref<8x2xf32, #tpu.memory_space<vmem>>, vector<8x2xf32>,
    %390 = arith.addf %356, %361 : vector<8x16xf32>
    %c0_173 = arith.constant 0 : index
    %c0_174 = arith.constant 0 : index
    %391 = vector.load %arg22[%c0_173, %c0_174] : memref<8x16xf32, #tpu.memory_space<vmem>>, vector<8x16xf32>
    tpu.vector_store %arg22[%c0_173, %c0_174], %390 {strides = array<i32>} : memref<8x16xf32, #tpu.memory_space<vmem>>, vector<8x16xf32>,
    return
  }
  func.func @transform_0(%arg0: i32) -> (i32, i32, i32) {
    %c0_i32 = arith.constant 0 : i32
    %c0_i32_0 = arith.constant 0 : i32
    %c0_i32_1 = arith.constant 0 : i32
    %c0_i32_2 = arith.constant 0 : i32
    return %c0_i32, %c0_i32_0, %c0_i32_1 : i32, i32, i32
  }
  func.func @transform_1(%arg0: i32) -> (i32, i32) {
    %c0_i32 = arith.constant 0 : i32
    %c0_i32_0 = arith.constant 0 : i32
    %c0_i32_1 = arith.constant 0 : i32
    return %c0_i32, %c0_i32_0 : i32, i32
  }
  func.func @transform_2(%arg0: i32) -> (i32, i32) {
    %c0_i32 = arith.constant 0 : i32
    %c0_i32_0 = arith.constant 0 : i32
    %c0_i32_1 = arith.constant 0 : i32
    return %c0_i32, %c0_i32_0 : i32, i32
  }
  func.func @transform_3(%arg0: i32) -> (i32, i32) {
    %c0_i32 = arith.constant 0 : i32
    %c0_i32_0 = arith.constant 0 : i32
    %c0_i32_1 = arith.constant 0 : i32
    return %c0_i32, %c0_i32_0 : i32, i32
  }
  func.func @transform_4(%arg0: i32) -> (i32, i32) {
    %c0_i32 = arith.constant 0 : i32
    %c0_i32_0 = arith.constant 0 : i32
    %c0_i32_1 = arith.constant 0 : i32
    return %c0_i32, %c0_i32_0 : i32, i32
  }
  func.func @transform_5(%arg0: i32) -> (i32, i32) {
    %c0_i32 = arith.constant 0 : i32
    %c0_i32_0 = arith.constant 0 : i32
    %c0_i32_1 = arith.constant 0 : i32
    return %c0_i32, %c0_i32_0 : i32, i32
  }
  func.func @transform_6(%arg0: i32) -> (i32, i32) {
    %c0_i32 = arith.constant 0 : i32
    %c0_i32_0 = arith.constant 0 : i32
    %c0_i32_1 = arith.constant 0 : i32
    return %c0_i32, %c0_i32_0 : i32, i32
  }
  func.func @transform_7(%arg0: i32) -> (i32, i32) {
    %c0_i32 = arith.constant 0 : i32
    %c0_i32_0 = arith.constant 0 : i32
    %c0_i32_1 = arith.constant 0 : i32
    return %c0_i32, %c0_i32_0 : i32, i32
  }
  func.func @transform_8(%arg0: i32) -> (i32, i32) {
    %c0_i32 = arith.constant 0 : i32
    %c0_i32_0 = arith.constant 0 : i32
    %c0_i32_1 = arith.constant 0 : i32
    return %c0_i32, %c0_i32_0 : i32, i32
  }
  func.func @transform_9(%arg0: i32) -> (i32, i32) {
    %c0_i32 = arith.constant 0 : i32
    %c0_i32_0 = arith.constant 0 : i32
    %c0_i32_1 = arith.constant 0 : i32
    return %c0_i32, %c0_i32_0 : i32, i32
  }
  func.func @transform_10(%arg0: i32) -> (i32, i32) {
    %c0_i32 = arith.constant 0 : i32
    %c0_i32_0 = arith.constant 0 : i32
    %c0_i32_1 = arith.constant 0 : i32
    return %c0_i32, %c0_i32_0 : i32, i32
  }
  func.func @transform_11(%arg0: i32) -> (i32, i32) {
    %c0_i32 = arith.constant 0 : i32
    %c0_i32_0 = arith.constant 0 : i32
    %c0_i32_1 = arith.constant 0 : i32
    return %c0_i32, %c0_i32_0 : i32, i32
  }
  func.func @transform_12(%arg0: i32) -> (i32, i32) {
    %c0_i32 = arith.constant 0 : i32
    %c0_i32_0 = arith.constant 0 : i32
    %c0_i32_1 = arith.constant 0 : i32
    return %c0_i32, %c0_i32_0 : i32, i32
  }
  func.func @transform_13(%arg0: i32) -> (i32, i32) {
    %c0_i32 = arith.constant 0 : i32
    %c0_i32_0 = arith.constant 0 : i32
    %c0_i32_1 = arith.constant 0 : i32
    return %c0_i32, %c0_i32_0 : i32, i32
  }
  func.func @transform_14(%arg0: i32) -> (i32, i32) {
    %c0_i32 = arith.constant 0 : i32
    %c0_i32_0 = arith.constant 0 : i32
    %c0_i32_1 = arith.constant 0 : i32
    return %c0_i32, %c0_i32_0 : i32, i32
  }
  func.func @transform_15(%arg0: i32) -> (i32, i32) {
    %c0_i32 = arith.constant 0 : i32
    %c0_i32_0 = arith.constant 0 : i32
    %c0_i32_1 = arith.constant 0 : i32
    return %c0_i32, %c0_i32_0 : i32, i32
  }
  func.func @transform_16(%arg0: i32) -> (i32, i32) {
    %c0_i32 = arith.constant 0 : i32
    %c0_i32_0 = arith.constant 0 : i32
    %c0_i32_1 = arith.constant 0 : i32
    return %c0_i32, %c0_i32_0 : i32, i32
  }
  func.func @transform_17(%arg0: i32) -> (i32, i32) {
    %c0_i32 = arith.constant 0 : i32
    %c0_i32_0 = arith.constant 0 : i32
    %c0_i32_1 = arith.constant 0 : i32
    return %c0_i32, %c0_i32_0 : i32, i32
  }
  func.func @transform_18(%arg0: i32) -> (i32, i32) {
    %c0_i32 = arith.constant 0 : i32
    %c0_i32_0 = arith.constant 0 : i32
    %c0_i32_1 = arith.constant 0 : i32
    return %c0_i32, %c0_i32_0 : i32, i32
  }
  func.func @transform_19(%arg0: i32) -> (i32, i32) {
    %c0_i32 = arith.constant 0 : i32
    %c0_i32_0 = arith.constant 0 : i32
    %c0_i32_1 = arith.constant 0 : i32
    return %c0_i32, %c0_i32_0 : i32, i32
  }
  func.func @transform_20(%arg0: i32) -> (i32, i32) {
    %c0_i32 = arith.constant 0 : i32
    %c0_i32_0 = arith.constant 0 : i32
    %c0_i32_1 = arith.constant 0 : i32
    return %c0_i32, %c0_i32_0 : i32, i32
  }
  func.func @transform_21(%arg0: i32) -> (i32, i32) {
    %c0_i32 = arith.constant 0 : i32
    %c0_i32_0 = arith.constant 0 : i32
    %c0_i32_1 = arith.constant 0 : i32
    return %c0_i32, %c0_i32_0 : i32, i32
  }
}

</mosaic_0001>

<llo_original>
// kernel: tpu_custom_call.1
$region0: #{tpu_custom_call.1}
  #allocation0 [shape = 'u32[]', space=smem, size = 0x4, offset = 0x4, fixed_abs, tag = 'smem constant byte address 0x4 - core index']
  #allocation1 [shape = 'u32[72,128]{1,0:T(1,128)}', space=vmem, size = 0x9000, scoped, tag = 'internal scratch']
  #allocation2 [shape = 'f32[8,32]{1,0:T(8,128)}', space=vmem, size = 0x1000, scoped, tag = 'scratch operand']
  #allocation3 [shape = 'f32[8,32]{1,0:T(8,128)}', space=vmem, size = 0x1000, scoped, tag = 'scratch operand']
  #allocation4 [shape = 'f32[8,8,128]{2,1,0:T(8,128)}', space=vmem, size = 0x8000, scoped, tag = 'scratch operand']
  %s0 = inlined_call_operand.vmem [shape: f32[8,8,16], index: 0, kind: input, shape index: {}]
  %s1 = inlined_call_operand.vmem [shape: s32[8,1], index: 1, kind: input, shape index: {}]
  %s2 = inlined_call_operand.vmem [shape: f32[16,128], index: 2, kind: input, shape index: {}]
  %s3 = inlined_call_operand.vmem [shape: f32[32,128], index: 3, kind: input, shape index: {}]
  %s4 = inlined_call_operand.vmem [shape: f32[1,128], index: 4, kind: input, shape index: {}]
  %s5 = inlined_call_operand.vmem [shape: f32[32,16], index: 5, kind: input, shape index: {}]
  %s6 = inlined_call_operand.vmem [shape: f32[1,16], index: 6, kind: input, shape index: {}]
  %s7 = inlined_call_operand.vmem [shape: f32[32,16], index: 7, kind: input, shape index: {}]
  %s8 = inlined_call_operand.vmem [shape: f32[1,16], index: 8, kind: input, shape index: {}]
  %s9 = inlined_call_operand.vmem [shape: f32[16,32], index: 9, kind: input, shape index: {}]
  %s10 = inlined_call_operand.vmem [shape: f32[1,32], index: 10, kind: input, shape index: {}]
  %s11 = inlined_call_operand.vmem [shape: f32[32,2], index: 11, kind: input, shape index: {}]
  %s12 = inlined_call_operand.vmem [shape: f32[1,2], index: 12, kind: input, shape index: {}]
  %s13 = inlined_call_operand.vmem [shape: f32[16,32], index: 13, kind: input, shape index: {}]
  %s14 = inlined_call_operand.vmem [shape: f32[1,32], index: 14, kind: input, shape index: {}]
  %s15 = inlined_call_operand.vmem [shape: f32[32,2], index: 15, kind: input, shape index: {}]
  %s16 = inlined_call_operand.vmem [shape: f32[1,2], index: 16, kind: input, shape index: {}]
  %s17 = inlined_call_operand.hbm [shape: f32[8,16], index: 17, kind: output, shape index: {0}]
  %s18 = inlined_call_operand.hbm [shape: f32[8,16], index: 18, kind: output, shape index: {1}]
  %s19 = inlined_call_operand.vmem [shape: f32[8,2], index: 19, kind: output, shape index: {2}]
  %s20 = inlined_call_operand.vmem [shape: f32[8,2], index: 20, kind: output, shape index: {3}]
  %s21 = inlined_call_operand.hbm [shape: f32[8,16], index: 21, kind: output, shape index: {4}]
  %22 = xla_tuple %s17, %s18, %s19, %s20, %s21
  %s23 = sld [smem:[#allocation0]]
  $region110: #{tpu_custom_call.1} parent=0
    _
  %s25 = ssub.s32 1, %s23
  %s26 = scalar_select 0, %s25, %s23
  $region1: #{tpu_custom_call.1} parent=0
    #allocation5 [shape = 'u8[4096]{0}', space=vmem, size = 0x1000, scoped, tag = 'output window, operand 0, single buffered']
    #allocation6 [shape = 's32[1]{0}', space=sflag, size = 0x4, scoped, tag = 'scoped memory for tpu_custom_call.1']
    #allocation7 [shape = 'u8[4096]{0}', space=vmem, size = 0x1000, scoped, tag = 'output window, operand 1, single buffered']
    #allocation8 [shape = 's32[1]{0}', space=sflag, size = 0x4, scoped, tag = 'scoped memory for tpu_custom_call.1']
    #allocation9 [shape = 'u8[4096]{0}', space=vmem, size = 0x1000, scoped, tag = 'output window, operand 4, single buffered']
    %27 = vsyncpa [#allocation6], 0
    %28 = vsyncpa [#allocation8], 0
    // Predicated region
    $region2: #{tpu_custom_call.1} parent=1 // pred_check
      _
    $region3: #{tpu_custom_call.1} parent=1 // pred_check_branch
      %30 = sbr.rel (0) target = $region5
    $region4: #{tpu_custom_call.1} parent=1 // pred_region
      _
    $region5: #{tpu_custom_call.1} parent=1 // pred_fallthru
      _
    // Predicated region
    $region6: #{tpu_custom_call.1} parent=1 // pred_check
      _
    $region7: #{tpu_custom_call.1} parent=1 // pred_check_branch
      %32 = sbr.rel (0) target = $region9
    $region8: #{tpu_custom_call.1} parent=1 // pred_region
      _
    $region9: #{tpu_custom_call.1} parent=1 // pred_fallthru
      _
    // Predicated region
    $region10: #{tpu_custom_call.1} parent=1 // pred_check
      _
    $region11: #{tpu_custom_call.1} parent=1 // pred_check_branch
      %34 = sbr.rel (0) target = $region13
    $region12: #{tpu_custom_call.1} parent=1 // pred_region
      _
    $region13: #{tpu_custom_call.1} parent=1 // pred_fallthru
      _
    // Predicated region
    $region14: #{tpu_custom_call.1} parent=1 // pred_check
      _
    $region15: #{tpu_custom_call.1} parent=1 // pred_check_branch
      %36 = sbr.rel (0) target = $region17
    $region16: #{tpu_custom_call.1} parent=1 // pred_region
      _
    $region17: #{tpu_custom_call.1} parent=1 // pred_fallthru
      _
    // Predicated region
    $region18: #{tpu_custom_call.1} parent=1 // pred_check
      _
    $region19: #{tpu_custom_call.1} parent=1 // pred_check_branch
      %38 = sbr.rel (0) target = $region21
    $region20: #{tpu_custom_call.1} parent=1 // pred_region
      _
    $region21: #{tpu_custom_call.1} parent=1 // pred_fallthru
      _
    // Predicated region
    $region22: #{tpu_custom_call.1} parent=1 // pred_check
      _
    $region23: #{tpu_custom_call.1} parent=1 // pred_check_branch
      %40 = sbr.rel (0) target = $region25
    $region24: #{tpu_custom_call.1} parent=1 // pred_region
      _
    $region25: #{tpu_custom_call.1} parent=1 // pred_fallthru
      _
    // Predicated region
    $region26: #{tpu_custom_call.1} parent=1 // pred_check
      _
    $region27: #{tpu_custom_call.1} parent=1 // pred_check_branch
      %42 = sbr.rel (0) target = $region29
    $region28: #{tpu_custom_call.1} parent=1 // pred_region
      _
    $region29: #{tpu_custom_call.1} parent=1 // pred_fallthru
      _
    // Predicated region
    $region30: #{tpu_custom_call.1} parent=1 // pred_check
      _
    $region31: #{tpu_custom_call.1} parent=1 // pred_check_branch
      %44 = sbr.rel (0) target = $region33
    $region32: #{tpu_custom_call.1} parent=1 // pred_region
      _
    $region33: #{tpu_custom_call.1} parent=1 // pred_fallthru
      _
    // Predicated region
    $region34: #{tpu_custom_call.1} parent=1 // pred_check
      _
    $region35: #{tpu_custom_call.1} parent=1 // pred_check_branch
      %46 = sbr.rel (0) target = $region37
    $region36: #{tpu_custom_call.1} parent=1 // pred_region
      _
    $region37: #{tpu_custom_call.1} parent=1 // pred_fallthru
      _
    // Predicated region
    $region38: #{tpu_custom_call.1} parent=1 // pred_check
      _
    $region39: #{tpu_custom_call.1} parent=1 // pred_check_branch
      %48 = sbr.rel (0) target = $region41
    $region40: #{tpu_custom_call.1} parent=1 // pred_region
      _
    $region41: #{tpu_custom_call.1} parent=1 // pred_fallthru
      _
    // Predicated region
    $region42: #{tpu_custom_call.1} parent=1 // pred_check
      _
    $region43: #{tpu_custom_call.1} parent=1 // pred_check_branch
      %50 = sbr.rel (0) target = $region45
    $region44: #{tpu_custom_call.1} parent=1 // pred_region
      _
    $region45: #{tpu_custom_call.1} parent=1 // pred_fallthru
      _
    // Predicated region
    $region46: #{tpu_custom_call.1} parent=1 // pred_check
      _
    $region47: #{tpu_custom_call.1} parent=1 // pred_check_branch
      %52 = sbr.rel (0) target = $region49
    $region48: #{tpu_custom_call.1} parent=1 // pred_region
      _
    $region49: #{tpu_custom_call.1} parent=1 // pred_fallthru
      _
    // Predicated region
    $region50: #{tpu_custom_call.1} parent=1 // pred_check
      _
    $region51: #{tpu_custom_call.1} parent=1 // pred_check_branch
      %54 = sbr.rel (0) target = $region53
    $region52: #{tpu_custom_call.1} parent=1 // pred_region
      _
    $region53: #{tpu_custom_call.1} parent=1 // pred_fallthru
      _
    // Predicated region
    $region54: #{tpu_custom_call.1} parent=1 // pred_check
      _
    $region55: #{tpu_custom_call.1} parent=1 // pred_check_branch
      %56 = sbr.rel (0) target = $region57
    $region56: #{tpu_custom_call.1} parent=1 // pred_region
      _
    $region57: #{tpu_custom_call.1} parent=1 // pred_fallthru
      _
    // Predicated region
    $region58: #{tpu_custom_call.1} parent=1 // pred_check
      _
    $region59: #{tpu_custom_call.1} parent=1 // pred_check_branch
      %58 = sbr.rel (0) target = $region61
    $region60: #{tpu_custom_call.1} parent=1 // pred_region
      _
    $region61: #{tpu_custom_call.1} parent=1 // pred_fallthru
      _
    // Predicated region
    $region62: #{tpu_custom_call.1} parent=1 // pred_check
      _
    $region63: #{tpu_custom_call.1} parent=1 // pred_check_branch
      %60 = sbr.rel (0) target = $region65
    $region64: #{tpu_custom_call.1} parent=1 // pred_region
      _
    $region65: #{tpu_custom_call.1} parent=1 // pred_fallthru
      _
    // Predicated region
    $region66: #{tpu_custom_call.1} parent=1 // pred_check
      _
    $region67: #{tpu_custom_call.1} parent=1 // pred_check_branch
      %62 = sbr.rel (0) target = $region69
    $region68: #{tpu_custom_call.1} parent=1 // pred_region
      _
    $region69: #{tpu_custom_call.1} parent=1 // pred_fallthru
      _
    %vm63 = vcmask 261120
    %64 = vst.msk [vmem:[#allocation2] sm:$0xff] %vm63, 0.0
    %65 = vst.msk [vmem:[#allocation3] sm:$0xff] %vm63, 0.0
    %v66 = vld [vmem:[%s0] sm:$0xff]
    %v67 = vld [vmem:[%s0 + $0x8] sm:$0xff]
    %v68 = vld [vmem:[%s0 + $0x10] sm:$0xff]
    %v69 = vld [vmem:[%s0 + $0x18] sm:$0xff]
    %v70 = vld [vmem:[%s0 + $0x20] sm:$0xff]
    %v71 = vld [vmem:[%s0 + $0x28] sm:$0xff]
    %v72 = vld [vmem:[%s0 + $0x30] sm:$0xff]
    %v73 = vld [vmem:[%s0 + $0x38] sm:$0xff]
    %v74 = vld [vmem:[%s2] sm:$0xff]
    %v75 = vld [vmem:[%s2 + $0x8] sm:$0xff]
    %v76 = vld [vmem:[%s4] sm:$0x1]
    %v78 = vperm.slane %v76, 0
    %vm80 = vcmask 130048
    %v82 = vsel %vm80, %v66, 0
    %v85 = vsel %vm80, %v67, 0
    %v88 = vsel %vm80, %v68, 0
    %v91 = vsel %vm80, %v69, 0
    %v94 = vsel %vm80, %v70, 0
    %v97 = vsel %vm80, %v71, 0
    %v100 = vsel %vm80, %v72, 0
    %v103 = vsel %vm80, %v73, 0
    %105 = vmatpush.msra.mxu0 0.0
    %106 = vmatpush.msra.mxu0 0.0
    %107 = vmatpush.msra.mxu0 0.0
    %108 = vmatpush.msra.mxu0 0.0
    %109 = vmatpush.msra.mxu0 0.0
    %110 = vmatpush.msra.mxu0 0.0
    %111 = vmatpush.msra.mxu0 0.0
    %112 = vmatpush.msra.mxu0 0.0
    %113 = vmatpush.msra.mxu0 0.0
    %114 = vmatpush.msra.mxu0 0.0
    %115 = vmatpush.msra.mxu0 0.0
    %116 = vmatpush.msra.mxu0 0.0
    %117 = vmatpush.msra.mxu0 0.0
    %118 = vmatpush.msra.mxu0 0.0
    %119 = vmatpush.msra.mxu0 %v75
    %120 = vmatpush.msra.mxu0 %v74
    %121 = vmatmul.f32.gmra.mxu0 %v82
    %v122 = vpop.f32.mrf.mxu0
    %v123 = vadd.f32 %v78, %v122
    %124 = vmatmul.f32.gmra.mxu0 %v85
    %v125 = vpop.f32.mrf.mxu0
    %v126 = vadd.f32 %v78, %v125
    %127 = vmatmul.f32.gmra.mxu0 %v88
    %v128 = vpop.f32.mrf.mxu0
    %v129 = vadd.f32 %v78, %v128
    %130 = vmatmul.f32.gmra.mxu0 %v91
    %v131 = vpop.f32.mrf.mxu0
    %v132 = vadd.f32 %v78, %v131
    %133 = vmatmul.f32.gmra.mxu0 %v94
    %v134 = vpop.f32.mrf.mxu0
    %v135 = vadd.f32 %v78, %v134
    %136 = vmatmul.f32.gmra.mxu0 %v97
    %v137 = vpop.f32.mrf.mxu0
    %v138 = vadd.f32 %v78, %v137
    %139 = vmatmul.f32.gmra.mxu0 %v100
    %v140 = vpop.f32.mrf.mxu0
    %v141 = vadd.f32 %v78, %v140
    %142 = vmatmul.f32.gmra.mxu0 %v103
    %v143 = vpop.f32.mrf.mxu0
    %v144 = vadd.f32 %v78, %v143
    %145 = vdwg.mxu0
    %146 = vst [vmem:[#allocation4] sm:$0xff] %v123
    %147 = vst [vmem:[#allocation4 + $0x8] sm:$0xff] %v126
    %148 = vst [vmem:[#allocation4 + $0x10] sm:$0xff] %v129
    %149 = vst [vmem:[#allocation4 + $0x18] sm:$0xff] %v132
    %150 = vst [vmem:[#allocation4 + $0x20] sm:$0xff] %v135
    %151 = vst [vmem:[#allocation4 + $0x28] sm:$0xff] %v138
    %152 = vst [vmem:[#allocation4 + $0x30] sm:$0xff] %v141
    %153 = vst [vmem:[#allocation4 + $0x38] sm:$0xff] %v144
    %v154 = vld [vmem:[%s3] sm:$0xff]
    %v155 = vld [vmem:[%s3 + $0x8] sm:$0xff]
    %v156 = vld [vmem:[%s3 + $0x10] sm:$0xff]
    %v157 = vld [vmem:[%s3 + $0x18] sm:$0xff]
    %v158 = vld [vmem:[%s1] sm:$0xff]
    %v159 = vld [vmem:[#allocation2] sm:$0xff]
    %v160 = vld [vmem:[#allocation3] sm:$0xff]
    %v161 = vld [vmem:[#allocation4] sm:$0xff]
    %v163 = vsel %vm63, %v159, 0
    %165 = vmatpush.msra.mxu0 0.0
    %166 = vmatpush.msra.mxu0 0.0
    %167 = vmatpush.msra.mxu0 0.0
    %168 = vmatpush.msra.mxu0 0.0
    %169 = vmatpush.msra.mxu0 0.0
    %170 = vmatpush.msra.mxu0 0.0
    %171 = vmatpush.msra.mxu0 0.0
    %172 = vmatpush.msra.mxu0 0.0
    %173 = vmatpush.msra.mxu0 0.0
    %174 = vmatpush.msra.mxu0 0.0
    %175 = vmatpush.msra.mxu0 0.0
    %176 = vmatpush.msra.mxu0 0.0
    %177 = vmatpush.msra.mxu0 %v157
    %178 = vmatpush.msra.mxu0 %v156
    %179 = vmatpush.msra.mxu0 %v155
    %180 = vmatpush.msra.mxu0 %v154
    %181 = vmatmul.f32.gmra.mxu0 %v163
    %v182 = vpop.f32.mrf.mxu0
    %v183 = vadd.f32 0.0, %v182
    %184 = vdwg.mxu0
    %v185 = vadd.f32 %v161, %v183
    %v186 = vxor.u32 %v185, 2147483648
    %v187 = vmul.f32 %v186, 1.442695
    %v188 = vpow.pop %v187
    %v189 = vadd.f32 %v188, 1.0
    %v190 = vrcp.pop %v189
    %v191 = vmul.f32 %v189, %v190
    %v192 = vsub.f32 1.0, %v191
    %v193 = vmul.f32 %v190, %v192
    %v194 = vadd.f32 %v190, %v193
    %vm195 = vweird.f32 %v189
    %vm196 = vweird.f32 %v190
    %vm197 = vmor %vm195, %vm196
    %v198 = vsel %vm197, %v190, %v194
    %v199 = vand.u32 2147483647, %v189
    %vm200 = vcmp.eq.f32.partialorder %v199, 8.507059e+37
    %v201 = vand.u32 %v189, 2147483648
    %v202 = vor.u32 1.1754944e-38, %v201
    %v203 = vsel %vm200, %v202, %v198
    %v204 = vmul.f32 1.0, %v203
    %v205 = vtanh.pop %v185
    %207 = vrot.lane.b32.xlu0 %v160, 32
    %v208 = vpop.permute.xlu0 %207
    %v210 = vmul.f32 %v204, %v208
    %212 = vrot.lane.b32.xlu0 %v205, 64
    %v213 = vpop.permute.xlu0 %212
    %v215 = vmul.f32 %v204, %v213
    %217 = vrot.lane.b32.xlu0 %v215, 32
    %v218 = vpop.permute.xlu0 %217
    %v220 = vadd.f32 %v210, %v218
    %v221 = vtanh.pop %v220
    %223 = vrot.lane.b32.xlu0 %v221, 64
    %v224 = vpop.permute.xlu0 %223
    %v226 = vmul.f32 %v204, %v224
    %vm227 = vcmp.gt.s32.totalorder %v158, 0
    %v228 = vsel %vm227, 1, 0
    %229 = vset.pattern.permute.xlu0 0
    %230 = vperm.xlu0 %229, %v228
    %v231 = vpop.permute.xlu0 %230
    %vm232 = vcmp.eq.s32.totalorder %v231, 1
    %v233 = vsel %vm232, %v220, %v208
    %235 = vrot.lane.b32.xlu0 %v233, 96
    %v236 = vpop.permute.xlu0 %235
    %238 = vst.msk [vmem:[#allocation3] sm:$0xff] %vm63, %v236
    %239 = vrot.lane.b32.xlu0 %v159, 96
    %v240 = vpop.permute.xlu0 %239
    %v242 = vsel %vm232, %v226, %v240
    %244 = vrot.lane.b32.xlu0 %v242, 32
    %v245 = vpop.permute.xlu0 %244
    %247 = vst.msk [vmem:[#allocation2] sm:$0xff] %vm63, %v245
    %v248 = vld [vmem:[#allocation2] sm:$0xff]
    %v249 = vld [vmem:[#allocation3] sm:$0xff]
    %s250 = scalar_lea.vmem [#allocation4], 8
    %v251 = vld [vmem:[%s250] sm:$0xff]
    %v253 = vsel %vm63, %v248, 0
    %255 = vmatpush.msra.mxu0 0.0
    %256 = vmatpush.msra.mxu0 0.0
    %257 = vmatpush.msra.mxu0 0.0
    %258 = vmatpush.msra.mxu0 0.0
    %259 = vmatpush.msra.mxu0 0.0
    %260 = vmatpush.msra.mxu0 0.0
    %261 = vmatpush.msra.mxu0 0.0
    %262 = vmatpush.msra.mxu0 0.0
    %263 = vmatpush.msra.mxu0 0.0
    %264 = vmatpush.msra.mxu0 0.0
    %265 = vmatpush.msra.mxu0 0.0
    %266 = vmatpush.msra.mxu0 0.0
    %267 = vmatpush.msra.mxu0 %v157
    %268 = vmatpush.msra.mxu0 %v156
    %269 = vmatpush.msra.mxu0 %v155
    %270 = vmatpush.msra.mxu0 %v154
    %271 = vmatmul.f32.gmra.mxu0 %v253
    %v272 = vpop.f32.mrf.mxu0
    %v273 = vadd.f32 0.0, %v272
    %274 = vdwg.mxu0
    %v275 = vadd.f32 %v251, %v273
    %v276 = vxor.u32 %v275, 2147483648
    %v277 = vmul.f32 %v276, 1.442695
    %v278 = vpow.pop %v277
    %v279 = vadd.f32 %v278, 1.0
    %v280 = vrcp.pop %v279
    %v281 = vmul.f32 %v279, %v280
    %v282 = vsub.f32 1.0, %v281
    %v283 = vmul.f32 %v280, %v282
    %v284 = vadd.f32 %v280, %v283
    %vm285 = vweird.f32 %v279
    %vm286 = vweird.f32 %v280
    %vm287 = vmor %vm285, %vm286
    %v288 = vsel %vm287, %v280, %v284
    %v289 = vand.u32 2147483647, %v279
    %vm290 = vcmp.eq.f32.partialorder %v289, 8.507059e+37
    %v291 = vand.u32 %v279, 2147483648
    %v292 = vor.u32 1.1754944e-38, %v291
    %v293 = vsel %vm290, %v292, %v288
    %v294 = vmul.f32 1.0, %v293
    %v295 = vtanh.pop %v275
    %297 = vrot.lane.b32.xlu0 %v249, 32
    %v298 = vpop.permute.xlu0 %297
    %v300 = vmul.f32 %v294, %v298
    %302 = vrot.lane.b32.xlu0 %v295, 64
    %v303 = vpop.permute.xlu0 %302
    %v305 = vmul.f32 %v294, %v303
    %307 = vrot.lane.b32.xlu0 %v305, 32
    %v308 = vpop.permute.xlu0 %307
    %v310 = vadd.f32 %v300, %v308
    %v311 = vtanh.pop %v310
    %313 = vrot.lane.b32.xlu0 %v311, 64
    %v314 = vpop.permute.xlu0 %313
    %v316 = vmul.f32 %v294, %v314
    %vm317 = vcmp.gt.s32.totalorder %v158, 1
    %v318 = vsel %vm317, 1, 0
    %319 = vset.pattern.permute.xlu0 0
    %320 = vperm.xlu0 %319, %v318
    %v321 = vpop.permute.xlu0 %320
    %vm322 = vcmp.eq.s32.totalorder %v321, 1
    %v323 = vsel %vm322, %v310, %v298
    %325 = vrot.lane.b32.xlu0 %v323, 96
    %v326 = vpop.permute.xlu0 %325
    %328 = vst.msk [vmem:[#allocation3] sm:$0xff] %vm63, %v326
    %329 = vrot.lane.b32.xlu0 %v248, 96
    %v330 = vpop.permute.xlu0 %329
    %v332 = vsel %vm322, %v316, %v330
    %334 = vrot.lane.b32.xlu0 %v332, 32
    %v335 = vpop.permute.xlu0 %334
    %337 = vst.msk [vmem:[#allocation2] sm:$0xff] %vm63, %v335
    %v338 = vld [vmem:[#allocation2] sm:$0xff]
    %v339 = vld [vmem:[#allocation3] sm:$0xff]
    %s340 = scalar_lea.vmem [#allocation4], 16
    %v341 = vld [vmem:[%s340] sm:$0xff]
    %v343 = vsel %vm63, %v338, 0
    %345 = vmatpush.msra.mxu0 0.0
    %346 = vmatpush.msra.mxu0 0.0
    %347 = vmatpush.msra.mxu0 0.0
    %348 = vmatpush.msra.mxu0 0.0
    %349 = vmatpush.msra.mxu0 0.0
    %350 = vmatpush.msra.mxu0 0.0
    %351 = vmatpush.msra.mxu0 0.0
    %352 = vmatpush.msra.mxu0 0.0
    %353 = vmatpush.msra.mxu0 0.0
    %354 = vmatpush.msra.mxu0 0.0
    %355 = vmatpush.msra.mxu0 0.0
    %356 = vmatpush.msra.mxu0 0.0
    %357 = vmatpush.msra.mxu0 %v157
    %358 = vmatpush.msra.mxu0 %v156
    %359 = vmatpush.msra.mxu0 %v155
    %360 = vmatpush.msra.mxu0 %v154
    %361 = vmatmul.f32.gmra.mxu0 %v343
    %v362 = vpop.f32.mrf.mxu0
    %v363 = vadd.f32 0.0, %v362
    %364 = vdwg.mxu0
    %v365 = vadd.f32 %v341, %v363
    %v366 = vxor.u32 %v365, 2147483648
    %v367 = vmul.f32 %v366, 1.442695
    %v368 = vpow.pop %v367
    %v369 = vadd.f32 %v368, 1.0
    %v370 = vrcp.pop %v369
    %v371 = vmul.f32 %v369, %v370
    %v372 = vsub.f32 1.0, %v371
    %v373 = vmul.f32 %v370, %v372
    %v374 = vadd.f32 %v370, %v373
    %vm375 = vweird.f32 %v369
    %vm376 = vweird.f32 %v370
    %vm377 = vmor %vm375, %vm376
    %v378 = vsel %vm377, %v370, %v374
    %v379 = vand.u32 2147483647, %v369
    %vm380 = vcmp.eq.f32.partialorder %v379, 8.507059e+37
    %v381 = vand.u32 %v369, 2147483648
    %v382 = vor.u32 1.1754944e-38, %v381
    %v383 = vsel %vm380, %v382, %v378
    %v384 = vmul.f32 1.0, %v383
    %v385 = vtanh.pop %v365
    %387 = vrot.lane.b32.xlu0 %v339, 32
    %v388 = vpop.permute.xlu0 %387
    %v390 = vmul.f32 %v384, %v388
    %392 = vrot.lane.b32.xlu0 %v385, 64
    %v393 = vpop.permute.xlu0 %392
    %v395 = vmul.f32 %v384, %v393
    %397 = vrot.lane.b32.xlu0 %v395, 32
    %v398 = vpop.permute.xlu0 %397
    %v400 = vadd.f32 %v390, %v398
    %v401 = vtanh.pop %v400
    %403 = vrot.lane.b32.xlu0 %v401, 64
    %v404 = vpop.permute.xlu0 %403
    %v406 = vmul.f32 %v384, %v404
    %vm407 = vcmp.gt.s32.totalorder %v158, 2
    %v408 = vsel %vm407, 1, 0
    %409 = vset.pattern.permute.xlu0 0
    %410 = vperm.xlu0 %409, %v408
    %v411 = vpop.permute.xlu0 %410
    %vm412 = vcmp.eq.s32.totalorder %v411, 1
    %v413 = vsel %vm412, %v400, %v388
    %415 = vrot.lane.b32.xlu0 %v413, 96
    %v416 = vpop.permute.xlu0 %415
    %418 = vst.msk [vmem:[#allocation3] sm:$0xff] %vm63, %v416
    %419 = vrot.lane.b32.xlu0 %v338, 96
    %v420 = vpop.permute.xlu0 %419
    %v422 = vsel %vm412, %v406, %v420
    %424 = vrot.lane.b32.xlu0 %v422, 32
    %v425 = vpop.permute.xlu0 %424
    %427 = vst.msk [vmem:[#allocation2] sm:$0xff] %vm63, %v425
    %v428 = vld [vmem:[#allocation2] sm:$0xff]
    %v429 = vld [vmem:[#allocation3] sm:$0xff]
    %s430 = scalar_lea.vmem [#allocation4], 24
    %v431 = vld [vmem:[%s430] sm:$0xff]
    %v433 = vsel %vm63, %v428, 0
    %435 = vmatpush.msra.mxu0 0.0
    %436 = vmatpush.msra.mxu0 0.0
    %437 = vmatpush.msra.mxu0 0.0
    %438 = vmatpush.msra.mxu0 0.0
    %439 = vmatpush.msra.mxu0 0.0
    %440 = vmatpush.msra.mxu0 0.0
    %441 = vmatpush.msra.mxu0 0.0
    %442 = vmatpush.msra.mxu0 0.0
    %443 = vmatpush.msra.mxu0 0.0
    %444 = vmatpush.msra.mxu0 0.0
    %445 = vmatpush.msra.mxu0 0.0
    %446 = vmatpush.msra.mxu0 0.0
    %447 = vmatpush.msra.mxu0 %v157
    %448 = vmatpush.msra.mxu0 %v156
    %449 = vmatpush.msra.mxu0 %v155
    %450 = vmatpush.msra.mxu0 %v154
    %451 = vmatmul.f32.gmra.mxu0 %v433
    %v452 = vpop.f32.mrf.mxu0
    %v453 = vadd.f32 0.0, %v452
    %454 = vdwg.mxu0
    %v455 = vadd.f32 %v431, %v453
    %v456 = vxor.u32 %v455, 2147483648
    %v457 = vmul.f32 %v456, 1.442695
    %v458 = vpow.pop %v457
    %v459 = vadd.f32 %v458, 1.0
    %v460 = vrcp.pop %v459
    %v461 = vmul.f32 %v459, %v460
    %v462 = vsub.f32 1.0, %v461
    %v463 = vmul.f32 %v460, %v462
    %v464 = vadd.f32 %v460, %v463
    %vm465 = vweird.f32 %v459
    %vm466 = vweird.f32 %v460
    %vm467 = vmor %vm465, %vm466
    %v468 = vsel %vm467, %v460, %v464
    %v469 = vand.u32 2147483647, %v459
    %vm470 = vcmp.eq.f32.partialorder %v469, 8.507059e+37
    %v471 = vand.u32 %v459, 2147483648
    %v472 = vor.u32 1.1754944e-38, %v471
    %v473 = vsel %vm470, %v472, %v468
    %v474 = vmul.f32 1.0, %v473
    %v475 = vtanh.pop %v455
    %477 = vrot.lane.b32.xlu0 %v429, 32
    %v478 = vpop.permute.xlu0 %477
    %v480 = vmul.f32 %v474, %v478
    %482 = vrot.lane.b32.xlu0 %v475, 64
    %v483 = vpop.permute.xlu0 %482
    %v485 = vmul.f32 %v474, %v483
    %487 = vrot.lane.b32.xlu0 %v485, 32
    %v488 = vpop.permute.xlu0 %487
    %v490 = vadd.f32 %v480, %v488
    %v491 = vtanh.pop %v490
    %493 = vrot.lane.b32.xlu0 %v491, 64
    %v494 = vpop.permute.xlu0 %493
    %v496 = vmul.f32 %v474, %v494
    %vm497 = vcmp.gt.s32.totalorder %v158, 3
    %v498 = vsel %vm497, 1, 0
    %499 = vset.pattern.permute.xlu0 0
    %500 = vperm.xlu0 %499, %v498
    %v501 = vpop.permute.xlu0 %500
    %vm502 = vcmp.eq.s32.totalorder %v501, 1
    %v503 = vsel %vm502, %v490, %v478
    %505 = vrot.lane.b32.xlu0 %v503, 96
    %v506 = vpop.permute.xlu0 %505
    %508 = vst.msk [vmem:[#allocation3] sm:$0xff] %vm63, %v506
    %509 = vrot.lane.b32.xlu0 %v428, 96
    %v510 = vpop.permute.xlu0 %509
    %v512 = vsel %vm502, %v496, %v510
    %514 = vrot.lane.b32.xlu0 %v512, 32
    %v515 = vpop.permute.xlu0 %514
    %517 = vst.msk [vmem:[#allocation2] sm:$0xff] %vm63, %v515
    %v518 = vld [vmem:[#allocation2] sm:$0xff]
    %v519 = vld [vmem:[#allocation3] sm:$0xff]
    %s520 = scalar_lea.vmem [#allocation4], 32
    %v521 = vld [vmem:[%s520] sm:$0xff]
    %v523 = vsel %vm63, %v518, 0
    %525 = vmatpush.msra.mxu0 0.0
    %526 = vmatpush.msra.mxu0 0.0
    %527 = vmatpush.msra.mxu0 0.0
    %528 = vmatpush.msra.mxu0 0.0
    %529 = vmatpush.msra.mxu0 0.0
    %530 = vmatpush.msra.mxu0 0.0
    %531 = vmatpush.msra.mxu0 0.0
    %532 = vmatpush.msra.mxu0 0.0
    %533 = vmatpush.msra.mxu0 0.0
    %534 = vmatpush.msra.mxu0 0.0
    %535 = vmatpush.msra.mxu0 0.0
    %536 = vmatpush.msra.mxu0 0.0
    %537 = vmatpush.msra.mxu0 %v157
    %538 = vmatpush.msra.mxu0 %v156
    %539 = vmatpush.msra.mxu0 %v155
    %540 = vmatpush.msra.mxu0 %v154
    %541 = vmatmul.f32.gmra.mxu0 %v523
    %v542 = vpop.f32.mrf.mxu0
    %v543 = vadd.f32 0.0, %v542
    %544 = vdwg.mxu0
    %v545 = vadd.f32 %v521, %v543
    %v546 = vxor.u32 %v545, 2147483648
    %v547 = vmul.f32 %v546, 1.442695
    %v548 = vpow.pop %v547
    %v549 = vadd.f32 %v548, 1.0
    %v550 = vrcp.pop %v549
    %v551 = vmul.f32 %v549, %v550
    %v552 = vsub.f32 1.0, %v551
    %v553 = vmul.f32 %v550, %v552
    %v554 = vadd.f32 %v550, %v553
    %vm555 = vweird.f32 %v549
    %vm556 = vweird.f32 %v550
    %vm557 = vmor %vm555, %vm556
    %v558 = vsel %vm557, %v550, %v554
    %v559 = vand.u32 2147483647, %v549
    %vm560 = vcmp.eq.f32.partialorder %v559, 8.507059e+37
    %v561 = vand.u32 %v549, 2147483648
    %v562 = vor.u32 1.1754944e-38, %v561
    %v563 = vsel %vm560, %v562, %v558
    %v564 = vmul.f32 1.0, %v563
    %v565 = vtanh.pop %v545
    %567 = vrot.lane.b32.xlu0 %v519, 32
    %v568 = vpop.permute.xlu0 %567
    %v570 = vmul.f32 %v564, %v568
    %572 = vrot.lane.b32.xlu0 %v565, 64
    %v573 = vpop.permute.xlu0 %572
    %v575 = vmul.f32 %v564, %v573
    %577 = vrot.lane.b32.xlu0 %v575, 32
    %v578 = vpop.permute.xlu0 %577
    %v580 = vadd.f32 %v570, %v578
    %v581 = vtanh.pop %v580
    %583 = vrot.lane.b32.xlu0 %v581, 64
    %v584 = vpop.permute.xlu0 %583
    %v586 = vmul.f32 %v564, %v584
    %vm587 = vcmp.gt.s32.totalorder %v158, 4
    %v588 = vsel %vm587, 1, 0
    %589 = vset.pattern.permute.xlu0 0
    %590 = vperm.xlu0 %589, %v588
    %v591 = vpop.permute.xlu0 %590
    %vm592 = vcmp.eq.s32.totalorder %v591, 1
    %v593 = vsel %vm592, %v580, %v568
    %595 = vrot.lane.b32.xlu0 %v593, 96
    %v596 = vpop.permute.xlu0 %595
    %598 = vst.msk [vmem:[#allocation3] sm:$0xff] %vm63, %v596
    %599 = vrot.lane.b32.xlu0 %v518, 96
    %v600 = vpop.permute.xlu0 %599
    %v602 = vsel %vm592, %v586, %v600
    %604 = vrot.lane.b32.xlu0 %v602, 32
    %v605 = vpop.permute.xlu0 %604
    %607 = vst.msk [vmem:[#allocation2] sm:$0xff] %vm63, %v605
    %v608 = vld [vmem:[#allocation2] sm:$0xff]
    %v609 = vld [vmem:[#allocation3] sm:$0xff]
    %s610 = scalar_lea.vmem [#allocation4], 40
    %v611 = vld [vmem:[%s610] sm:$0xff]
    %v613 = vsel %vm63, %v608, 0
    %615 = vmatpush.msra.mxu0 0.0
    %616 = vmatpush.msra.mxu0 0.0
    %617 = vmatpush.msra.mxu0 0.0
    %618 = vmatpush.msra.mxu0 0.0
    %619 = vmatpush.msra.mxu0 0.0
    %620 = vmatpush.msra.mxu0 0.0
    %621 = vmatpush.msra.mxu0 0.0
    %622 = vmatpush.msra.mxu0 0.0
    %623 = vmatpush.msra.mxu0 0.0
    %624 = vmatpush.msra.mxu0 0.0
    %625 = vmatpush.msra.mxu0 0.0
    %626 = vmatpush.msra.mxu0 0.0
    %627 = vmatpush.msra.mxu0 %v157
    %628 = vmatpush.msra.mxu0 %v156
    %629 = vmatpush.msra.mxu0 %v155
    %630 = vmatpush.msra.mxu0 %v154
    %631 = vmatmul.f32.gmra.mxu0 %v613
    %v632 = vpop.f32.mrf.mxu0
    %v633 = vadd.f32 0.0, %v632
    %634 = vdwg.mxu0
    %v635 = vadd.f32 %v611, %v633
    %v636 = vxor.u32 %v635, 2147483648
    %v637 = vmul.f32 %v636, 1.442695
    %v638 = vpow.pop %v637
    %v639 = vadd.f32 %v638, 1.0
    %v640 = vrcp.pop %v639
    %v641 = vmul.f32 %v639, %v640
    %v642 = vsub.f32 1.0, %v641
    %v643 = vmul.f32 %v640, %v642
    %v644 = vadd.f32 %v640, %v643
    %vm645 = vweird.f32 %v639
    %vm646 = vweird.f32 %v640
    %vm647 = vmor %vm645, %vm646
    %v648 = vsel %vm647, %v640, %v644
    %v649 = vand.u32 2147483647, %v639
    %vm650 = vcmp.eq.f32.partialorder %v649, 8.507059e+37
    %v651 = vand.u32 %v639, 2147483648
    %v652 = vor.u32 1.1754944e-38, %v651
    %v653 = vsel %vm650, %v652, %v648
    %v654 = vmul.f32 1.0, %v653
    %v655 = vtanh.pop %v635
    %657 = vrot.lane.b32.xlu0 %v609, 32
    %v658 = vpop.permute.xlu0 %657
    %v660 = vmul.f32 %v654, %v658
    %662 = vrot.lane.b32.xlu0 %v655, 64
    %v663 = vpop.permute.xlu0 %662
    %v665 = vmul.f32 %v654, %v663
    %667 = vrot.lane.b32.xlu0 %v665, 32
    %v668 = vpop.permute.xlu0 %667
    %v670 = vadd.f32 %v660, %v668
    %v671 = vtanh.pop %v670
    %673 = vrot.lane.b32.xlu0 %v671, 64
    %v674 = vpop.permute.xlu0 %673
    %v676 = vmul.f32 %v654, %v674
    %vm677 = vcmp.gt.s32.totalorder %v158, 5
    %v678 = vsel %vm677, 1, 0
    %679 = vset.pattern.permute.xlu0 0
    %680 = vperm.xlu0 %679, %v678
    %v681 = vpop.permute.xlu0 %680
    %vm682 = vcmp.eq.s32.totalorder %v681, 1
    %v683 = vsel %vm682, %v670, %v658
    %685 = vrot.lane.b32.xlu0 %v683, 96
    %v686 = vpop.permute.xlu0 %685
    %688 = vst.msk [vmem:[#allocation3] sm:$0xff] %vm63, %v686
    %689 = vrot.lane.b32.xlu0 %v608, 96
    %v690 = vpop.permute.xlu0 %689
    %v692 = vsel %vm682, %v676, %v690
    %694 = vrot.lane.b32.xlu0 %v692, 32
    %v695 = vpop.permute.xlu0 %694
    %697 = vst.msk [vmem:[#allocation2] sm:$0xff] %vm63, %v695
    %v698 = vld [vmem:[#allocation2] sm:$0xff]
    %v699 = vld [vmem:[#allocation3] sm:$0xff]
    %s700 = scalar_lea.vmem [#allocation4], 48
    %v701 = vld [vmem:[%s700] sm:$0xff]
    %v703 = vsel %vm63, %v698, 0
    %705 = vmatpush.msra.mxu0 0.0
    %706 = vmatpush.msra.mxu0 0.0
    %707 = vmatpush.msra.mxu0 0.0
    %708 = vmatpush.msra.mxu0 0.0
    %709 = vmatpush.msra.mxu0 0.0
    %710 = vmatpush.msra.mxu0 0.0
    %711 = vmatpush.msra.mxu0 0.0
    %712 = vmatpush.msra.mxu0 0.0
    %713 = vmatpush.msra.mxu0 0.0
    %714 = vmatpush.msra.mxu0 0.0
    %715 = vmatpush.msra.mxu0 0.0
    %716 = vmatpush.msra.mxu0 0.0
    %717 = vmatpush.msra.mxu0 %v157
    %718 = vmatpush.msra.mxu0 %v156
    %719 = vmatpush.msra.mxu0 %v155
    %720 = vmatpush.msra.mxu0 %v154
    %721 = vmatmul.f32.gmra.mxu0 %v703
    %v722 = vpop.f32.mrf.mxu0
    %v723 = vadd.f32 0.0, %v722
    %724 = vdwg.mxu0
    %v725 = vadd.f32 %v701, %v723
    %v726 = vxor.u32 %v725, 2147483648
    %v727 = vmul.f32 %v726, 1.442695
    %v728 = vpow.pop %v727
    %v729 = vadd.f32 %v728, 1.0
    %v730 = vrcp.pop %v729
    %v731 = vmul.f32 %v729, %v730
    %v732 = vsub.f32 1.0, %v731
    %v733 = vmul.f32 %v730, %v732
    %v734 = vadd.f32 %v730, %v733
    %vm735 = vweird.f32 %v729
    %vm736 = vweird.f32 %v730
    %vm737 = vmor %vm735, %vm736
    %v738 = vsel %vm737, %v730, %v734
    %v739 = vand.u32 2147483647, %v729
    %vm740 = vcmp.eq.f32.partialorder %v739, 8.507059e+37
    %v741 = vand.u32 %v729, 2147483648
    %v742 = vor.u32 1.1754944e-38, %v741
    %v743 = vsel %vm740, %v742, %v738
    %v744 = vmul.f32 1.0, %v743
    %v745 = vtanh.pop %v725
    %747 = vrot.lane.b32.xlu0 %v699, 32
    %v748 = vpop.permute.xlu0 %747
    %v750 = vmul.f32 %v744, %v748
    %752 = vrot.lane.b32.xlu0 %v745, 64
    %v753 = vpop.permute.xlu0 %752
    %v755 = vmul.f32 %v744, %v753
    %757 = vrot.lane.b32.xlu0 %v755, 32
    %v758 = vpop.permute.xlu0 %757
    %v760 = vadd.f32 %v750, %v758
    %v761 = vtanh.pop %v760
    %763 = vrot.lane.b32.xlu0 %v761, 64
    %v764 = vpop.permute.xlu0 %763
    %v766 = vmul.f32 %v744, %v764
    %vm767 = vcmp.gt.s32.totalorder %v158, 6
    %v768 = vsel %vm767, 1, 0
    %769 = vset.pattern.permute.xlu0 0
    %770 = vperm.xlu0 %769, %v768
    %v771 = vpop.permute.xlu0 %770
    %vm772 = vcmp.eq.s32.totalorder %v771, 1
    %v773 = vsel %vm772, %v760, %v748
    %775 = vrot.lane.b32.xlu0 %v773, 96
    %v776 = vpop.permute.xlu0 %775
    %778 = vst.msk [vmem:[#allocation3] sm:$0xff] %vm63, %v776
    %779 = vrot.lane.b32.xlu0 %v698, 96
    %v780 = vpop.permute.xlu0 %779
    %v782 = vsel %vm772, %v766, %v780
    %784 = vrot.lane.b32.xlu0 %v782, 32
    %v785 = vpop.permute.xlu0 %784
    %787 = vst.msk [vmem:[#allocation2] sm:$0xff] %vm63, %v785
    %v788 = vld [vmem:[#allocation2] sm:$0xff]
    %v789 = vld [vmem:[#allocation3] sm:$0xff]
    %s790 = scalar_lea.vmem [#allocation4], 56
    %v791 = vld [vmem:[%s790] sm:$0xff]
    %v793 = vsel %vm63, %v788, 0
    %795 = vmatpush.msra.mxu0 0.0
    %796 = vmatpush.msra.mxu0 0.0
    %797 = vmatpush.msra.mxu0 0.0
    %798 = vmatpush.msra.mxu0 0.0
    %799 = vmatpush.msra.mxu0 0.0
    %800 = vmatpush.msra.mxu0 0.0
    %801 = vmatpush.msra.mxu0 0.0
    %802 = vmatpush.msra.mxu0 0.0
    %803 = vmatpush.msra.mxu0 0.0
    %804 = vmatpush.msra.mxu0 0.0
    %805 = vmatpush.msra.mxu0 0.0
    %806 = vmatpush.msra.mxu0 0.0
    %807 = vmatpush.msra.mxu0 %v157
    %808 = vmatpush.msra.mxu0 %v156
    %809 = vmatpush.msra.mxu0 %v155
    %810 = vmatpush.msra.mxu0 %v154
    %811 = vmatmul.f32.gmra.mxu0 %v793
    %v812 = vpop.f32.mrf.mxu0
    %v813 = vadd.f32 0.0, %v812
    %814 = vdwg.mxu0
    %v815 = vadd.f32 %v791, %v813
    %v816 = vxor.u32 %v815, 2147483648
    %v817 = vmul.f32 %v816, 1.442695
    %v818 = vpow.pop %v817
    %v819 = vadd.f32 %v818, 1.0
    %v820 = vrcp.pop %v819
    %v821 = vmul.f32 %v819, %v820
    %v822 = vsub.f32 1.0, %v821
    %v823 = vmul.f32 %v820, %v822
    %v824 = vadd.f32 %v820, %v823
    %vm825 = vweird.f32 %v819
    %vm826 = vweird.f32 %v820
    %vm827 = vmor %vm825, %vm826
    %v828 = vsel %vm827, %v820, %v824
    %v829 = vand.u32 2147483647, %v819
    %vm830 = vcmp.eq.f32.partialorder %v829, 8.507059e+37
    %v831 = vand.u32 %v819, 2147483648
    %v832 = vor.u32 1.1754944e-38, %v831
    %v833 = vsel %vm830, %v832, %v828
    %v834 = vmul.f32 1.0, %v833
    %v835 = vtanh.pop %v815
    %837 = vrot.lane.b32.xlu0 %v789, 32
    %v838 = vpop.permute.xlu0 %837
    %v840 = vmul.f32 %v834, %v838
    %842 = vrot.lane.b32.xlu0 %v835, 64
    %v843 = vpop.permute.xlu0 %842
    %v845 = vmul.f32 %v834, %v843
    %847 = vrot.lane.b32.xlu0 %v845, 32
    %v848 = vpop.permute.xlu0 %847
    %v850 = vadd.f32 %v840, %v848
    %v851 = vtanh.pop %v850
    %853 = vrot.lane.b32.xlu0 %v851, 64
    %v854 = vpop.permute.xlu0 %853
    %v856 = vmul.f32 %v834, %v854
    %vm857 = vcmp.gt.s32.totalorder %v158, 7
    %v858 = vsel %vm857, 1, 0
    %859 = vset.pattern.permute.xlu0 0
    %860 = vperm.xlu0 %859, %v858
    %v861 = vpop.permute.xlu0 %860
    %vm862 = vcmp.eq.s32.totalorder %v861, 1
    %v863 = vsel %vm862, %v850, %v838
    %865 = vrot.lane.b32.xlu0 %v863, 96
    %v866 = vpop.permute.xlu0 %865
    %868 = vst.msk [vmem:[#allocation3] sm:$0xff] %vm63, %v866
    %869 = vrot.lane.b32.xlu0 %v788, 96
    %v870 = vpop.permute.xlu0 %869
    %v872 = vsel %vm862, %v856, %v870
    %874 = vrot.lane.b32.xlu0 %v872, 32
    %v875 = vpop.permute.xlu0 %874
    %877 = vst.msk [vmem:[#allocation2] sm:$0xff] %vm63, %v875
    %v878 = vld [vmem:[#allocation2] sm:$0xff]
    %v879 = vld [vmem:[%s5] sm:$0xff]
    %v880 = vld [vmem:[%s5 + $0x8] sm:$0xff]
    %v881 = vld [vmem:[%s5 + $0x10] sm:$0xff]
    %v882 = vld [vmem:[%s5 + $0x18] sm:$0xff]
    %v883 = vld [vmem:[%s6] sm:$0x1]
    %v885 = vperm.slane %v883, 0
    %v888 = vsel %vm63, %v878, 0
    %890 = vmatpush.msra.mxu0 0.0
    %891 = vmatpush.msra.mxu0 0.0
    %892 = vmatpush.msra.mxu0 0.0
    %893 = vmatpush.msra.mxu0 0.0
    %894 = vmatpush.msra.mxu0 0.0
    %895 = vmatpush.msra.mxu0 0.0
    %896 = vmatpush.msra.mxu0 0.0
    %897 = vmatpush.msra.mxu0 0.0
    %898 = vmatpush.msra.mxu0 0.0
    %899 = vmatpush.msra.mxu0 0.0
    %900 = vmatpush.msra.mxu0 0.0
    %901 = vmatpush.msra.mxu0 0.0
    %902 = vmatpush.msra.mxu0 %v882
    %903 = vmatpush.msra.mxu0 %v881
    %904 = vmatpush.msra.mxu0 %v880
    %905 = vmatpush.msra.mxu0 %v879
    %906 = vmatmul.f32.gmra.mxu0 %v888
    %v907 = vpop.f32.mrf.mxu0
    %v908 = vadd.f32 %v885, %v907
    %909 = vdwg.mxu0
    %v910 = vld [vmem:[%s7] sm:$0xff]
    %v911 = vld [vmem:[%s7 + $0x8] sm:$0xff]
    %v912 = vld [vmem:[%s7 + $0x10] sm:$0xff]
    %v913 = vld [vmem:[%s7 + $0x18] sm:$0xff]
    %v914 = vld [vmem:[%s8] sm:$0x1]
    %v916 = vperm.slane %v914, 0
    %918 = vmatpush.msra.mxu0 0.0
    %919 = vmatpush.msra.mxu0 0.0
    %920 = vmatpush.msra.mxu0 0.0
    %921 = vmatpush.msra.mxu0 0.0
    %922 = vmatpush.msra.mxu0 0.0
    %923 = vmatpush.msra.mxu0 0.0
    %924 = vmatpush.msra.mxu0 0.0
    %925 = vmatpush.msra.mxu0 0.0
    %926 = vmatpush.msra.mxu0 0.0
    %927 = vmatpush.msra.mxu0 0.0
    %928 = vmatpush.msra.mxu0 0.0
    %929 = vmatpush.msra.mxu0 0.0
    %930 = vmatpush.msra.mxu0 %v913
    %931 = vmatpush.msra.mxu0 %v912
    %932 = vmatpush.msra.mxu0 %v911
    %933 = vmatpush.msra.mxu0 %v910
    %934 = vmatmul.f32.gmra.mxu0 %v888
    %v935 = vpop.f32.mrf.mxu0
    %v936 = vadd.f32 %v916, %v935
    %937 = vdwg.mxu0
    %v938 = vld [vmem:[%s9] sm:$0xff]
    %v939 = vld [vmem:[%s9 + $0x8] sm:$0xff]
    %v940 = vld [vmem:[%s10] sm:$0x1]
    %v942 = vperm.slane %v940, 0
    %v945 = vsel %vm80, %v936, 0
    %947 = vmatpush.msra.mxu0 0.0
    %948 = vmatpush.msra.mxu0 0.0
    %949 = vmatpush.msra.mxu0 0.0
    %950 = vmatpush.msra.mxu0 0.0
    %951 = vmatpush.msra.mxu0 0.0
    %952 = vmatpush.msra.mxu0 0.0
    %953 = vmatpush.msra.mxu0 0.0
    %954 = vmatpush.msra.mxu0 0.0
    %955 = vmatpush.msra.mxu0 0.0
    %956 = vmatpush.msra.mxu0 0.0
    %957 = vmatpush.msra.mxu0 0.0
    %958 = vmatpush.msra.mxu0 0.0
    %959 = vmatpush.msra.mxu0 0.0
    %960 = vmatpush.msra.mxu0 0.0
    %961 = vmatpush.msra.mxu0 %v939
    %962 = vmatpush.msra.mxu0 %v938
    %963 = vmatmul.f32.gmra.mxu0 %v945
    %v964 = vpop.f32.mrf.mxu0
    %v965 = vadd.f32 %v942, %v964
    %966 = vdwg.mxu0
    %v967 = vmax.f32 %v965, 0.0
    %v968 = vld [vmem:[%s11] sm:$0xff]
    %v969 = vld [vmem:[%s11 + $0x8] sm:$0xff]
    %v970 = vld [vmem:[%s11 + $0x10] sm:$0xff]
    %v971 = vld [vmem:[%s11 + $0x18] sm:$0xff]
    %v972 = vld [vmem:[%s12] sm:$0x1]
    %v974 = vperm.slane %v972, 0
    %v977 = vsel %vm63, %v967, 0
    %979 = vmatpush.msra.mxu0 0.0
    %980 = vmatpush.msra.mxu0 0.0
    %981 = vmatpush.msra.mxu0 0.0
    %982 = vmatpush.msra.mxu0 0.0
    %983 = vmatpush.msra.mxu0 0.0
    %984 = vmatpush.msra.mxu0 0.0
    %985 = vmatpush.msra.mxu0 0.0
    %986 = vmatpush.msra.mxu0 0.0
    %987 = vmatpush.msra.mxu0 0.0
    %988 = vmatpush.msra.mxu0 0.0
    %989 = vmatpush.msra.mxu0 0.0
    %990 = vmatpush.msra.mxu0 0.0
    %991 = vmatpush.msra.mxu0 %v971
    %992 = vmatpush.msra.mxu0 %v970
    %993 = vmatpush.msra.mxu0 %v969
    %994 = vmatpush.msra.mxu0 %v968
    %995 = vmatmul.f32.gmra.mxu0 %v977
    %v996 = vpop.f32.mrf.mxu0
    %v997 = vadd.f32 %v974, %v996
    %998 = vdwg.mxu0
    %v999 = vld [vmem:[%s13] sm:$0xff]
    %v1000 = vld [vmem:[%s13 + $0x8] sm:$0xff]
    %v1001 = vld [vmem:[%s14] sm:$0x1]
    %v1003 = vperm.slane %v1001, 0
    %v1006 = vsel %vm80, %v908, 0
    %1008 = vmatpush.msra.mxu0 0.0
    %1009 = vmatpush.msra.mxu0 0.0
    %1010 = vmatpush.msra.mxu0 0.0
    %1011 = vmatpush.msra.mxu0 0.0
    %1012 = vmatpush.msra.mxu0 0.0
    %1013 = vmatpush.msra.mxu0 0.0
    %1014 = vmatpush.msra.mxu0 0.0
    %1015 = vmatpush.msra.mxu0 0.0
    %1016 = vmatpush.msra.mxu0 0.0
    %1017 = vmatpush.msra.mxu0 0.0
    %1018 = vmatpush.msra.mxu0 0.0
    %1019 = vmatpush.msra.mxu0 0.0
    %1020 = vmatpush.msra.mxu0 0.0
    %1021 = vmatpush.msra.mxu0 0.0
    %1022 = vmatpush.msra.mxu0 %v1000
    %1023 = vmatpush.msra.mxu0 %v999
    %1024 = vmatmul.f32.gmra.mxu0 %v1006
    %v1025 = vpop.f32.mrf.mxu0
    %v1026 = vadd.f32 %v1003, %v1025
    %1027 = vdwg.mxu0
    %v1028 = vmax.f32 %v1026, 0.0
    %v1029 = vld [vmem:[%s15] sm:$0xff]
    %v1030 = vld [vmem:[%s15 + $0x8] sm:$0xff]
    %v1031 = vld [vmem:[%s15 + $0x10] sm:$0xff]
    %v1032 = vld [vmem:[%s15 + $0x18] sm:$0xff]
    %v1033 = vld [vmem:[%s16] sm:$0x1]
    %v1035 = vperm.slane %v1033, 0
    %v1038 = vsel %vm63, %v1028, 0
    %1040 = vmatpush.msra.mxu0 0.0
    %1041 = vmatpush.msra.mxu0 0.0
    %1042 = vmatpush.msra.mxu0 0.0
    %1043 = vmatpush.msra.mxu0 0.0
    %1044 = vmatpush.msra.mxu0 0.0
    %1045 = vmatpush.msra.mxu0 0.0
    %1046 = vmatpush.msra.mxu0 0.0
    %1047 = vmatpush.msra.mxu0 0.0
    %1048 = vmatpush.msra.mxu0 0.0
    %1049 = vmatpush.msra.mxu0 0.0
    %1050 = vmatpush.msra.mxu0 0.0
    %1051 = vmatpush.msra.mxu0 0.0
    %1052 = vmatpush.msra.mxu0 %v1032
    %1053 = vmatpush.msra.mxu0 %v1031
    %1054 = vmatpush.msra.mxu0 %v1030
    %1055 = vmatpush.msra.mxu0 %v1029
    %1056 = vmatmul.f32.gmra.mxu0 %v1038
    %v1057 = vpop.f32.mrf.mxu0
    %v1058 = vadd.f32 %v1035, %v1057
    %1059 = vdwg.mxu0
    %1060 = vst.msk [vmem:[#allocation5] sm:$0xff] %vm80, %v908
    %1061 = vst.msk [vmem:[#allocation7] sm:$0xff] %vm80, %v936
    %vm1062 = vcmask 15360
    %1063 = vst.msk [vmem:[%s19] sm:$0xff] %vm1062, %v997
    %1064 = vst.msk [vmem:[%s20] sm:$0xff] %vm1062, %v1058
    %v1065 = vadd.f32 %v908, %v936
    %1066 = vst.msk [vmem:[#allocation9] sm:$0xff] %vm80, %v1065
    // Predicated region
    $region70: #{tpu_custom_call.1} parent=1 // pred_check
      _
    $region71: #{tpu_custom_call.1} parent=1 // pred_check_branch
      %1068 = sbr.rel (0) target = $region73
    $region72: #{tpu_custom_call.1} parent=1 // pred_region
      %1070 = vsyncadd [#allocation6], 0
      %s1072 = sshll.u32 [#allocation5], 4
      %s1073 = int_to_ptr.vmem [resolvable:$true] %s1072
      %s1074 = sshll.u32 %s17, 4
      %s1075 = int_to_ptr.hbm [resolvable:$true] %s1074
      %1077 = dma.vmem_to_hbm [thread:$0]  %s1073, 128, %s1075, [#allocation6]
    $region73: #{tpu_custom_call.1} parent=1 // pred_fallthru
      _
    // Predicated region
    $region74: #{tpu_custom_call.1} parent=1 // pred_check
      _
    $region75: #{tpu_custom_call.1} parent=1 // pred_check_branch
      %1079 = sbr.rel (0) target = $region77
    $region76: #{tpu_custom_call.1} parent=1 // pred_region
      %1081 = vsyncadd [#allocation8], 0
      %s1083 = sshll.u32 [#allocation7], 4
      %s1084 = int_to_ptr.vmem [resolvable:$true] %s1083
      %s1085 = sshll.u32 %s18, 4
      %s1086 = int_to_ptr.hbm [resolvable:$true] %s1085
      %1088 = dma.vmem_to_hbm [thread:$0]  %s1084, 128, %s1086, [#allocation8]
    $region77: #{tpu_custom_call.1} parent=1 // pred_fallthru
      _
    // Predicated region
    $region78: #{tpu_custom_call.1} parent=1 // pred_check
      _
    $region79: #{tpu_custom_call.1} parent=1 // pred_check_branch
      %1090 = sbr.rel (0) target = $region81
    $region80: #{tpu_custom_call.1} parent=1 // pred_region
      _
    $region81: #{tpu_custom_call.1} parent=1 // pred_fallthru
      _
    // Predicated region
    $region82: #{tpu_custom_call.1} parent=1 // pred_check
      _
    $region83: #{tpu_custom_call.1} parent=1 // pred_check_branch
      %1092 = sbr.rel (0) target = $region85
    $region84: #{tpu_custom_call.1} parent=1 // pred_region
      _
    $region85: #{tpu_custom_call.1} parent=1 // pred_fallthru
      _
    // Predicated region
    $region86: #{tpu_custom_call.1} parent=1 // pred_check
      _
    $region87: #{tpu_custom_call.1} parent=1 // pred_check_branch
      %1094 = sbr.rel (0) target = $region89
    $region88: #{tpu_custom_call.1} parent=1 // pred_region
      %1096 = vsyncadd [#allocation8], 0
      %s1098 = sshll.u32 [#allocation9], 4
      %s1099 = int_to_ptr.vmem [resolvable:$true] %s1098
      %s1100 = sshll.u32 %s21, 4
      %s1101 = int_to_ptr.hbm [resolvable:$true] %s1100
      %1103 = dma.vmem_to_hbm [thread:$0]  %s1099, 128, %s1101, [#allocation8]
    $region89: #{tpu_custom_call.1} parent=1 // pred_fallthru
      _
    // Predicated region
    $region90: #{tpu_custom_call.1} parent=1 // pred_check
      _
    $region91: #{tpu_custom_call.1} parent=1 // pred_check_branch
      %1105 = sbr.rel (0) target = $region93
    $region92: #{tpu_custom_call.1} parent=1 // pred_region
      %1107 = dma.done [#allocation6], 128
    $region93: #{tpu_custom_call.1} parent=1 // pred_fallthru
      _
    // Predicated region
    $region94: #{tpu_custom_call.1} parent=1 // pred_check
      _
    $region95: #{tpu_custom_call.1} parent=1 // pred_check_branch
      %1109 = sbr.rel (0) target = $region97
    $region96: #{tpu_custom_call.1} parent=1 // pred_region
      %1111 = dma.done [#allocation8], 128
    $region97: #{tpu_custom_call.1} parent=1 // pred_fallthru
      _
    // Predicated region
    $region98: #{tpu_custom_call.1} parent=1 // pred_check
      _
    $region99: #{tpu_custom_call.1} parent=1 // pred_check_branch
      %1113 = sbr.rel (0) target = $region101
    $region100: #{tpu_custom_call.1} parent=1 // pred_region
      _
    $region101: #{tpu_custom_call.1} parent=1 // pred_fallthru
      _
    // Predicated region
    $region102: #{tpu_custom_call.1} parent=1 // pred_check
      _
    $region103: #{tpu_custom_call.1} parent=1 // pred_check_branch
      %1115 = sbr.rel (0) target = $region105
    $region104: #{tpu_custom_call.1} parent=1 // pred_region
      _
    $region105: #{tpu_custom_call.1} parent=1 // pred_fallthru
      _
    // Predicated region
    $region106: #{tpu_custom_call.1} parent=1 // pred_check
      _
    $region107: #{tpu_custom_call.1} parent=1 // pred_check_branch
      %1117 = sbr.rel (0) target = $region109
    $region108: #{tpu_custom_call.1} parent=1 // pred_region
      %1119 = dma.done [#allocation8], 128
    $region109: #{tpu_custom_call.1} parent=1 // pred_fallthru
      _
    %1120 = vsyncpa [#allocation6], 1
    %1121 = vsyncpa [#allocation8], 1

</llo_original>
